<compile_context>
chip_gen: v7x
topology: tpu7x:2x2x1
jax: 0.10.0
libtpu: 0.0.40
codegen_flags: <defaults>
</compile_context>

<pallas_src>
import functools

import jax
import jax.numpy as jnp
from jax.experimental import pallas as pl
from jax.experimental.pallas import tpu as pltpu


_W_ORDER = ("w_att_hi", "wlo_x", "wlo_m", "w_aggn", "w_node_p", "w_node_a",
            "b_node", "we_e", "we_u", "we_v", "b_edge")


def _round_up(x, m):
    return ((x + m - 1) // m) * m


def _cdiv(a, b):
    return (a + b - 1) // b


# ----------------------------------------------------------------------------
# Fused Pallas kernel: attention reduce + node readout + edge readout,
# grid = (node_blocks [parallel], relations [arbitrary / accumulated]).
# All relation weights live in VMEM for the whole grid; r selects the slab.
# ----------------------------------------------------------------------------
def _hetero_kernel(sel_ref, selt_ref, x_ref, mail_ref, hu_ref,
                   w_att_hi_ref, wlo_x_ref, wlo_m_ref, w_aggn_ref,
                   w_node_p_ref, w_node_a_ref, b_node_ref,
                   we_e_ref, we_u_ref, we_v_ref, b_edge_ref,
                   node_out_ref, edge_out_ref):
    f32 = jnp.float32
    r = pl.program_id(1)

    x = x_ref[...]          # [tn, d]    dst node feats (stream dtype, e.g. bf16)
    mail = mail_ref[...]    # [tn, K*d]  lane-flat mailbox == edge feats tile
    hu = hu_ref[...]        # [tn, K*d]  lane-flat gathered src feats
    mail_f = mail.astype(f32)   # explicit upcast for the VPU/EUP path (v5e-safe)

    # ---- attention scores, concat-free: q[:, d:] pre-tiled across K groups ----
    # (the q[:, :d]·x score term is constant over k and cancels in softmax)
    q2t = jnp.dot(x, w_att_hi_ref[r], preferred_element_type=f32)             # [tn, K*d]
    scores = jnp.dot(mail_f * q2t, sel_ref[...], preferred_element_type=f32)  # [tn, K]

    m = jnp.max(scores, axis=-1, keepdims=True)
    p = jnp.exp(scores - m)
    attw = p * pl.reciprocal(jnp.sum(p, axis=-1, keepdims=True), approx=False)

    # mix = [x, sum_k attw_k * mail_k]  (sum_k attw_k == 1, so the x half is x)
    attw_exp = jnp.dot(attw, selt_ref[...], preferred_element_type=f32)       # [tn, K*d]
    wmail = (attw_exp * mail_f).astype(x.dtype)                               # bf16 for MXU

    # att_out = tanh([x, mix_mail, q] @ W_lin_out); q-path folded into wlo_x
    att_pre = (jnp.dot(x, wlo_x_ref[r], preferred_element_type=f32)
               + jnp.dot(wmail, wlo_m_ref[r], preferred_element_type=f32))
    att_out = jnp.tanh(att_pre)                                               # [tn, 2d] f32

    # agg_neis: Linear(2d, d, bias=False) + ReLU
    agg = jnp.maximum(jnp.dot(att_out.astype(x.dtype), w_aggn_ref[r],
                              preferred_element_type=f32), 0.0)               # [tn, d]

    # node_readout(cat([agg_mlp(x), agg])); agg_mlp path folded into w_node_p
    node_contrib = (jnp.dot(x, w_node_p_ref[r], preferred_element_type=f32)
                    + jnp.dot(agg.astype(x.dtype), w_node_a_ref[r],
                              preferred_element_type=f32)
                    + b_node_ref[r].astype(f32))                              # [tn, out]

    # HeteroGraphConv aggregate='sum': resident f32 accumulator over relations.
    @pl.when(r == 0)
    def _():
        node_out_ref[...] = jnp.zeros_like(node_out_ref)
    node_out_ref[...] += node_contrib.astype(node_out_ref.dtype)

    # ---- fused edge readout, lane-dense [tn, K*out] slab ----------------------
    # edge_readout(cat([e, h_u, h_v])): e / h_u via K-block-diagonal weights on
    # the lane-flat slabs; h_v is the dst row repeated K times -> x @ tile(W_v).
    edge_out_ref[...] = (
        jnp.dot(mail, we_e_ref[r], preferred_element_type=f32)
        + jnp.dot(hu, we_u_ref[r], preferred_element_type=f32)
        + jnp.dot(x, we_v_ref[r], preferred_element_type=f32)
        + b_edge_ref[r].astype(f32)).astype(edge_out_ref.dtype)


# ----------------------------------------------------------------------------
# One-time weight prep (hoisted off the forward path): split / tile / kron so
# the kernel is concat-free, fold the purely linear q- and agg_mlp-paths into
# neighbouring weights (exact), stack over relations, cast to stream dtype.
# ----------------------------------------------------------------------------
def prep_hetero_weights(params_per_rel, rel_names, *, K, dtype=jnp.bfloat16):
    d = params_per_rel[rel_names[0]]["w_att"].shape[0]
    eye_k = jnp.eye(K, dtype=jnp.float32)
    prepped = []
    for rel in rel_names:
        p = params_per_rel[rel]
        w_att = p["w_att"]          # [d, 2d]
        w_lo = p["w_lin_out"]       # [4d, 2d]
        w_edge = p["w_edge"]        # [3d, out]
        prepped.append({
            # q[:, d:] pre-tiled across the K lane groups for the dot scores
            "w_att_hi": jnp.tile(w_att[:, d:], (1, K)),            # [d, K*d]
            # fold: x@wlo_x + (x@w_att)@wlo_q == x@(wlo_x + w_att@wlo_q)
            "wlo_x": w_lo[:d] + w_att @ w_lo[2 * d:],              # [d, 2d]
            "wlo_m": jnp.tile(w_lo[d:2 * d], (K, 1)),              # [K*d, 2d]
            "w_aggn": p["w_aggn"],                                 # [2d, d]
            # fold: (x@w_aggm)@w_node[:d] == x@(w_aggm@w_node[:d])
            "w_node_p": p["w_aggm"] @ p["w_node"][:d],             # [d, out]
            "w_node_a": p["w_node"][d:],                           # [d, out]
            "b_node": p["b_node"],                                 # [1, out]
            "we_e": jnp.kron(eye_k, w_edge[:d]),                   # [K*d, K*out]
            "we_u": jnp.kron(eye_k, w_edge[d:2 * d]),              # [K*d, K*out]
            "we_v": jnp.tile(w_edge[2 * d:], (1, K)),              # [d, K*out]
            "b_edge": jnp.tile(p["b_edge"], (1, K)),               # [1, K*out]
        })
    return {name: jnp.stack([q[name] for q in prepped]).astype(dtype)
            for name in _W_ORDER}


# ----------------------------------------------------------------------------
# HeteroGraphConv(aggregate='sum') of HomoAttentionConv over all relations,
# one fused pallas_call.
# ----------------------------------------------------------------------------
@functools.partial(jax.jit, static_argnames=("K", "tn"))
def hetero_conv(node_feats, edge_feats, src_idx, weights, *, K, tn=1024):
    """node_feats [N,d] f32; edge_feats [R,E,d] dst-sorted fixed in-degree K
    (E=N*K); src_idx [R,E] int32; weights from prep_hetero_weights.
    Returns node_out [N,out] f32 and edge_out [R,E,out] (stream dtype)."""
    R, E, d = edge_feats.shape
    N = node_feats.shape[0]
    assert E == N * K, "edges must be dst-sorted with fixed in-degree K"
    out_dim = weights["b_node"].shape[-1]
    Kd = K * d
    sdt = weights["we_e"].dtype          # stream dtype (bf16 by default)
    f32 = jnp.float32

    # Lane-dense feature slabs (the edge tile for dst block i IS the mailbox).
    x = node_feats.astype(sdt)                                 # [N, d]
    mail = edge_feats.astype(sdt).reshape(R, N, Kd)            # [R, N, K*d]
    # TODO(synk): replace this XLA gather with an in-kernel DMA gather driven by
    # scalar-prefetched src_idx so h_u never round-trips through HBM.
    hu = x[src_idx].reshape(R, N, Kd)                          # [R, N, K*d]

    # Segment-selector constants for the per-node softmax on lane-flat slabs.
    sel = jnp.repeat(jnp.eye(K, dtype=f32), d, axis=0)         # [K*d, K]
    selt = sel.T                                               # [K, K*d]

    # Tile sizing: 8-aligned, as big as tn allows, and >=2 node blocks whenever
    # possible so both v7x TensorCores get work on the 'parallel' axis.
    tn_eff = max(8, min(_round_up(tn, 8), _round_up(N, 8)))
    if N > 8 and _cdiv(N, tn_eff) < 2:
        tn_eff = _round_up(_cdiv(N, 2), 8)
    Np = _round_up(N, tn_eff)
    if Np != N:
        pad = Np - N
        x = jnp.pad(x, ((0, pad), (0, 0)))
        mail = jnp.pad(mail, ((0, 0), (0, pad), (0, 0)))
        hu = jnp.pad(hu, ((0, 0), (0, pad), (0, 0)))
    n_blocks = Np // tn_eff

    # Relation weights: full stacked blocks + constant index_map -> DMA'd into
    # VMEM once and resident for the whole grid (r is the innermost axis, so
    # per-step (None, ...) slices would re-fetch ~100s of KB every step).
    w_specs = [pl.BlockSpec(weights[name].shape, lambda i, r: (0, 0, 0))
               for name in _W_ORDER]

    grid_spec = pltpu.PrefetchScalarGridSpec(
        num_scalar_prefetch=0,
        grid=(n_blocks, R),
        in_specs=[
            pl.BlockSpec((Kd, K), lambda i, r: (0, 0)),                # sel
            pl.BlockSpec((K, Kd), lambda i, r: (0, 0)),                # selt
            pl.BlockSpec((tn_eff, d), lambda i, r: (i, 0)),            # dst feats
            pl.BlockSpec((None, tn_eff, Kd), lambda i, r: (r, i, 0)),  # mailbox/edge
            pl.BlockSpec((None, tn_eff, Kd), lambda i, r: (r, i, 0)),  # h_u
        ] + w_specs,
        out_specs=[
            pl.BlockSpec((tn_eff, out_dim), lambda i, r: (i, 0)),      # node acc
            pl.BlockSpec((None, tn_eff, K * out_dim), lambda i, r: (r, i, 0)),
        ],
    )

    # Advisory cost estimate so XLA schedules neighbouring ops sensibly.
    flops_row = 2 * (d * Kd + Kd * K + K * Kd + d * 2 * d + Kd * 2 * d
                     + 2 * d * d + 2 * d * out_dim
                     + 2 * Kd * K * out_dim + d * K * out_dim)
    item = jnp.dtype(sdt).itemsize
    cost = pl.CostEstimate(
        flops=int(flops_row * Np * R),
        transcendentals=int((K + 2 * d) * Np * R),
        bytes_accessed=int((x.size + mail.size + hu.size) * item
                           + sum(w.size for w in weights.values()) * item
                           + Np * out_dim * 4
                           + R * Np * K * out_dim * item))

    node_out, edge_out = pl.pallas_call(
        _hetero_kernel,
        out_shape=(jax.ShapeDtypeStruct((Np, out_dim), f32),
                   jax.ShapeDtypeStruct((R, Np, K * out_dim), sdt)),
        grid_spec=grid_spec,
        compiler_params=pltpu.CompilerParams(
            dimension_semantics=("parallel", "arbitrary"),
            vmem_limit_bytes=64 * 1024 * 1024),
        cost_estimate=cost,
    )(sel, selt, x, mail, hu, *[weights[name] for name in _W_ORDER])

    node_out = node_out[:N]
    edge_out = edge_out[:, :N, :].reshape(R, N * K, out_dim)
    return node_out, edge_out


# ----------------------------------------------------------------------------
# Pure-JAX reference (straightforward, concat-based f32 math) for validation.
# ----------------------------------------------------------------------------
def homo_ref(dst_feats, mailbox, edge_feats, h_u, h_v, p):
    q = dst_feats @ p["w_att"]
    H = jnp.concatenate(
        [jnp.broadcast_to(dst_feats[:, None, :], mailbox.shape), mailbox], axis=-1)
    scores = jnp.einsum("nd,nkd->nk", q, H)
    attw = jax.nn.softmax(scores, axis=-1)
    mix = jnp.einsum("nk,nkd->nd", attw, H)
    att_out = jnp.tanh(jnp.concatenate([mix, q], -1) @ p["w_lin_out"])
    agg = jax.nn.relu(att_out @ p["w_aggn"])
    comb2 = jnp.concatenate([dst_feats @ p["w_aggm"], agg], -1)
    node_out = comb2 @ p["w_node"] + p["b_node"]
    edge_out = jnp.concatenate([edge_feats, h_u, h_v], -1) @ p["w_edge"] + p["b_edge"]
    return node_out, edge_out


# ----------------------------------------------------------------------------
# Parameter / graph construction
# ----------------------------------------------------------------------------
def make_params(key, d, out_dim):
    ks = jax.random.split(key, 8)
    s = 0.05
    return {
        # weights stored pre-transposed so the math is x @ W
        "w_att":     jax.random.normal(ks[0], (d, 2 * d), jnp.float32) * s,
        "w_lin_out": jax.random.normal(ks[1], (4 * d, 2 * d), jnp.float32) * s,
        "w_aggn":    jax.random.normal(ks[2], (2 * d, d), jnp.float32) * s,
        "w_aggm":    jax.random.normal(ks[3], (d, d), jnp.float32) * s,
        "w_node":    jax.random.normal(ks[4], (2 * d, out_dim), jnp.float32) * s,
        "b_node":    jax.random.normal(ks[5], (1, out_dim), jnp.float32) * s,
        "w_edge":    jax.random.normal(ks[6], (3 * d, out_dim), jnp.float32) * s,
        "b_edge":    jax.random.normal(ks[7], (1, out_dim), jnp.float32) * s,
    }


if __name__ == "__main__":
    # small synthetic hetero graph: one node type, two relations, fixed in-degree
    N_NODES, D, OUT, K = 16, 32, 32, 4          # K*D = 128 -> lane-perfect slabs
    REL_NAMES = ("rel_a", "rel_b")
    E = N_NODES * K

    key = jax.random.PRNGKey(0)
    k_feat, k_graph, k_param = jax.random.split(key, 3)

    node_feats = jax.random.normal(k_feat, (N_NODES, D), jnp.float32)

    graphs = {}
    for i, rel in enumerate(REL_NAMES):
        kg = jax.random.fold_in(k_graph, i)
        s_idx = jax.random.randint(kg, (E,), 0, N_NODES)
        d_idx = jnp.repeat(jnp.arange(N_NODES), K)        # dst-sorted, degree K
        ef = jax.random.normal(jax.random.fold_in(kg, 99), (E, D), jnp.float32)
        graphs[rel] = (s_idx, d_idx, ef, K)

    params = {rel: make_params(jax.random.fold_in(k_param, i), D, OUT)
              for i, rel in enumerate(REL_NAMES)}

    # One-time weight prep (off the jitted forward path); bf16 streams.
    weights = prep_hetero_weights(params, REL_NAMES, K=K, dtype=jnp.bfloat16)
    edge_feats = jnp.stack([graphs[r][2] for r in REL_NAMES])   # [R, E, D]
    src_idx = jnp.stack([graphs[r][0] for r in REL_NAMES])      # [R, E]

    node_out, edge_out = hetero_conv(node_feats, edge_feats, src_idx, weights, K=K)
    node_out = jax.block_until_ready(node_out)
    edge_out = jax.block_until_ready(edge_out)

    # reference check (f32 reference vs bf16-streamed kernel)
    ref_acc = None
    for ri, rel in enumerate(REL_NAMES):
        s_idx, d_idx, ef, Kd_ = graphs[rel]
        mailbox = ef.reshape(N_NODES, Kd_, D)
        n_ref, e_ref = homo_ref(node_feats, mailbox, ef,
                                node_feats[s_idx], node_feats[d_idx], params[rel])
        ref_acc = n_ref if ref_acc is None else ref_acc + n_ref
        assert jnp.allclose(edge_out[ri].astype(jnp.float32), e_ref,
                            atol=3e-2, rtol=3e-2), rel
    assert jnp.allclose(node_out, ref_acc, atol=2e-2, rtol=2e-2)
    assert node_out.shape == (N_NODES, OUT)

    print("KERNEL_OK")
</pallas_src>

<mosaic_0001>
module attributes {stable_mosaic.version = 11 : i64} {
  func.func @_hetero_kernel(%arg0: i32, %arg1: i32, %arg2: memref<128x4xf32, #tpu.memory_space<vmem>>, %arg3: memref<4x128xf32, #tpu.memory_space<vmem>>, %arg4: memref<8x32xbf16, #tpu.memory_space<vmem>>, %arg5: memref<1x8x128xbf16, #tpu.memory_space<vmem>>, %arg6: memref<1x8x128xbf16, #tpu.memory_space<vmem>>, %arg7: memref<2x32x128xbf16, #tpu.memory_space<vmem>>, %arg8: memref<2x32x64xbf16, #tpu.memory_space<vmem>>, %arg9: memref<2x128x64xbf16, #tpu.memory_space<vmem>>, %arg10: memref<2x64x32xbf16, #tpu.memory_space<vmem>>, %arg11: memref<2x32x32xbf16, #tpu.memory_space<vmem>>, %arg12: memref<2x32x32xbf16, #tpu.memory_space<vmem>>, %arg13: memref<2x1x32xbf16, #tpu.memory_space<vmem>>, %arg14: memref<2x128x128xbf16, #tpu.memory_space<vmem>>, %arg15: memref<2x128x128xbf16, #tpu.memory_space<vmem>>, %arg16: memref<2x32x128xbf16, #tpu.memory_space<vmem>>, %arg17: memref<2x1x128xbf16, #tpu.memory_space<vmem>>, %arg18: memref<8x32xf32, #tpu.memory_space<vmem>>, %arg19: memref<1x8x128xbf16, #tpu.memory_space<vmem>>) attributes {dimension_semantics = [#tpu.dimension_semantics<parallel>, #tpu.dimension_semantics<arbitrary>], iteration_bounds = array<i64: 2, 2>, scalar_prefetch = 0 : i64, scratch_operands = 0 : i64, tpu.core_type = #tpu.core_type<tc>, window_params = [{pipeline_mode = #tpu.pipeline_mode<synchronous>, transform_indices = @transform_0, window_bounds = array<i64: 128, 4>}, {pipeline_mode = #tpu.pipeline_mode<synchronous>, transform_indices = @transform_1, window_bounds = array<i64: 4, 128>}, {transform_indices = @transform_2, window_bounds = array<i64: 8, 32>}, {transform_indices = @transform_3, window_bounds = array<i64: 1, 8, 128>}, {transform_indices = @transform_4, window_bounds = array<i64: 1, 8, 128>}, {pipeline_mode = #tpu.pipeline_mode<synchronous>, transform_indices = @transform_5, window_bounds = array<i64: 2, 32, 128>}, {pipeline_mode = #tpu.pipeline_mode<synchronous>, transform_indices = @transform_6, window_bounds = array<i64: 2, 32, 64>}, {pipeline_mode = #tpu.pipeline_mode<synchronous>, transform_indices = @transform_7, window_bounds = array<i64: 2, 128, 64>}, {pipeline_mode = #tpu.pipeline_mode<synchronous>, transform_indices = @transform_8, window_bounds = array<i64: 2, 64, 32>}, {pipeline_mode = #tpu.pipeline_mode<synchronous>, transform_indices = @transform_9, window_bounds = array<i64: 2, 32, 32>}, {pipeline_mode = #tpu.pipeline_mode<synchronous>, transform_indices = @transform_10, window_bounds = array<i64: 2, 32, 32>}, {pipeline_mode = #tpu.pipeline_mode<synchronous>, transform_indices = @transform_11, window_bounds = array<i64: 2, 1, 32>}, {pipeline_mode = #tpu.pipeline_mode<synchronous>, transform_indices = @transform_12, window_bounds = array<i64: 2, 128, 128>}, {pipeline_mode = #tpu.pipeline_mode<synchronous>, transform_indices = @transform_13, window_bounds = array<i64: 2, 128, 128>}, {pipeline_mode = #tpu.pipeline_mode<synchronous>, transform_indices = @transform_14, window_bounds = array<i64: 2, 32, 128>}, {pipeline_mode = #tpu.pipeline_mode<synchronous>, transform_indices = @transform_15, window_bounds = array<i64: 2, 1, 128>}, {transform_indices = @transform_16, window_bounds = array<i64: 8, 32>}, {transform_indices = @transform_17, window_bounds = array<i64: 1, 8, 128>}]} {
    %c0 = arith.constant 0 : index
    %c0_0 = arith.constant 0 : index
    %0 = vector.load %arg4[%c0, %c0_0] : memref<8x32xbf16, #tpu.memory_space<vmem>>, vector<8x32xbf16>
    %c0_1 = arith.constant 0 : index
    %c0_2 = arith.constant 0 : index
    %c0_3 = arith.constant 0 : index
    %1 = vector.load %arg5[%c0_1, %c0_2, %c0_3] : memref<1x8x128xbf16, #tpu.memory_space<vmem>>, vector<1x8x128xbf16>
    %2 = vector.shape_cast %1 : vector<1x8x128xbf16> to vector<8x128xbf16>
    %c0_4 = arith.constant 0 : index
    %c0_5 = arith.constant 0 : index
    %c0_6 = arith.constant 0 : index
    %3 = vector.load %arg6[%c0_4, %c0_5, %c0_6] : memref<1x8x128xbf16, #tpu.memory_space<vmem>>, vector<1x8x128xbf16>
    %4 = vector.shape_cast %3 : vector<1x8x128xbf16> to vector<8x128xbf16>
    %5 = arith.extf %2 : vector<8x128xbf16> to vector<8x128xf32>
    %6 = arith.index_cast %arg1 : i32 to index
    %c0_7 = arith.constant 0 : index
    %c0_8 = arith.constant 0 : index
    %7 = vector.load %arg7[%6, %c0_7, %c0_8] : memref<2x32x128xbf16, #tpu.memory_space<vmem>>, vector<1x32x128xbf16>
    %8 = vector.shape_cast %7 : vector<1x32x128xbf16> to vector<32x128xbf16>
    %cst = arith.constant dense<0.000000e+00> : vector<8x128xf32>
    %9 = tpu.matmul %0, %8, %cst {dimension_numbers = #tpu.dot_dimension_numbers<[1], [0], [0], [1], [0, 0, 1, 1], [], []>} : vector<8x32xbf16>, vector<32x128xbf16>, vector<8x128xf32> -> vector<8x128xf32>
    %10 = arith.mulf %5, %9 : vector<8x128xf32>
    %c0_9 = arith.constant 0 : index
    %c0_10 = arith.constant 0 : index
    %11 = vector.load %arg2[%c0_9, %c0_10] : memref<128x4xf32, #tpu.memory_space<vmem>>, vector<128x4xf32>
    %cst_11 = arith.constant dense<0.000000e+00> : vector<8x4xf32>
    %12 = tpu.matmul %10, %11, %cst_11 {dimension_numbers = #tpu.dot_dimension_numbers<[1], [0], [0], [1], [0, 0, 1, 1], [], []>} : vector<8x128xf32>, vector<128x4xf32>, vector<8x4xf32> -> vector<8x4xf32>
    %cst_12 = arith.constant dense<0xFF800000> : vector<8xf32>
    %13 = vector.multi_reduction <maximumf>, %12, %cst_12 [1] : vector<8x4xf32> to vector<8xf32>
    %14 = vector.shape_cast %13 : vector<8xf32> to vector<8x1xf32>
    %15 = vector.broadcast %14 : vector<8x1xf32> to vector<8x4xf32>
    %16 = arith.subf %12, %15 : vector<8x4xf32>
    %17 = math.exp %16 : vector<8x4xf32>
    %cst_13 = arith.constant dense<0.000000e+00> : vector<8xf32>
    %18 = vector.multi_reduction <add>, %17, %cst_13 [1] : vector<8x4xf32> to vector<8xf32>
    %19 = vector.shape_cast %18 : vector<8xf32> to vector<8x1xf32>
    %20 = tpu.reciprocal %19 : vector<8x1xf32> -> vector<8x1xf32>
    %21 = vector.broadcast %20 : vector<8x1xf32> to vector<8x4xf32>
    %22 = arith.mulf %17, %21 : vector<8x4xf32>
    %c0_14 = arith.constant 0 : index
    %c0_15 = arith.constant 0 : index
    %23 = vector.load %arg3[%c0_14, %c0_15] : memref<4x128xf32, #tpu.memory_space<vmem>>, vector<4x128xf32>
    %cst_16 = arith.constant dense<0.000000e+00> : vector<8x128xf32>
    %24 = tpu.matmul %22, %23, %cst_16 {dimension_numbers = #tpu.dot_dimension_numbers<[1], [0], [0], [1], [0, 0, 1, 1], [], []>} : vector<8x4xf32>, vector<4x128xf32>, vector<8x128xf32> -> vector<8x128xf32>
    %25 = arith.mulf %24, %5 : vector<8x128xf32>
    %26 = arith.truncf %25 : vector<8x128xf32> to vector<8x128xbf16>
    %27 = arith.index_cast %arg1 : i32 to index
    %c0_17 = arith.constant 0 : index
    %c0_18 = arith.constant 0 : index
    %28 = vector.load %arg8[%27, %c0_17, %c0_18] : memref<2x32x64xbf16, #tpu.memory_space<vmem>>, vector<1x32x64xbf16>
    %29 = vector.shape_cast %28 : vector<1x32x64xbf16> to vector<32x64xbf16>
    %cst_19 = arith.constant dense<0.000000e+00> : vector<8x64xf32>
    %30 = tpu.matmul %0, %29, %cst_19 {dimension_numbers = #tpu.dot_dimension_numbers<[1], [0], [0], [1], [0, 0, 1, 1], [], []>} : vector<8x32xbf16>, vector<32x64xbf16>, vector<8x64xf32> -> vector<8x64xf32>
    %31 = arith.index_cast %arg1 : i32 to index
    %c0_20 = arith.constant 0 : index
    %c0_21 = arith.constant 0 : index
    %32 = vector.load %arg9[%31, %c0_20, %c0_21] : memref<2x128x64xbf16, #tpu.memory_space<vmem>>, vector<1x128x64xbf16>
    %33 = vector.shape_cast %32 : vector<1x128x64xbf16> to vector<128x64xbf16>
    %cst_22 = arith.constant dense<0.000000e+00> : vector<8x64xf32>
    %34 = tpu.matmul %26, %33, %cst_22 {dimension_numbers = #tpu.dot_dimension_numbers<[1], [0], [0], [1], [0, 0, 1, 1], [], []>} : vector<8x128xbf16>, vector<128x64xbf16>, vector<8x64xf32> -> vector<8x64xf32>
    %35 = arith.addf %30, %34 : vector<8x64xf32>
    %36 = math.tanh %35 : vector<8x64xf32>
    %37 = arith.truncf %36 : vector<8x64xf32> to vector<8x64xbf16>
    %38 = arith.index_cast %arg1 : i32 to index
    %c0_23 = arith.constant 0 : index
    %c0_24 = arith.constant 0 : index
    %39 = vector.load %arg10[%38, %c0_23, %c0_24] : memref<2x64x32xbf16, #tpu.memory_space<vmem>>, vector<1x64x32xbf16>
    %40 = vector.shape_cast %39 : vector<1x64x32xbf16> to vector<64x32xbf16>
    %cst_25 = arith.constant dense<0.000000e+00> : vector<8x32xf32>
    %41 = tpu.matmul %37, %40, %cst_25 {dimension_numbers = #tpu.dot_dimension_numbers<[1], [0], [0], [1], [0, 0, 1, 1], [], []>} : vector<8x64xbf16>, vector<64x32xbf16>, vector<8x32xf32> -> vector<8x32xf32>
    %cst_26 = arith.constant 0.000000e+00 : f32
    %42 = vector.broadcast %cst_26 : f32 to vector<8x32xf32>
    %43 = arith.maximumf %41, %42 : vector<8x32xf32>
    %44 = arith.index_cast %arg1 : i32 to index
    %c0_27 = arith.constant 0 : index
    %c0_28 = arith.constant 0 : index
    %45 = vector.load %arg11[%44, %c0_27, %c0_28] : memref<2x32x32xbf16, #tpu.memory_space<vmem>>, vector<1x32x32xbf16>
    %46 = vector.shape_cast %45 : vector<1x32x32xbf16> to vector<32x32xbf16>
    %cst_29 = arith.constant dense<0.000000e+00> : vector<8x32xf32>
    %47 = tpu.matmul %0, %46, %cst_29 {dimension_numbers = #tpu.dot_dimension_numbers<[1], [0], [0], [1], [0, 0, 1, 1], [], []>} : vector<8x32xbf16>, vector<32x32xbf16>, vector<8x32xf32> -> vector<8x32xf32>
    %48 = arith.truncf %43 : vector<8x32xf32> to vector<8x32xbf16>
    %49 = arith.index_cast %arg1 : i32 to index
    %c0_30 = arith.constant 0 : index
    %c0_31 = arith.constant 0 : index
    %50 = vector.load %arg12[%49, %c0_30, %c0_31] : memref<2x32x32xbf16, #tpu.memory_space<vmem>>, vector<1x32x32xbf16>
    %51 = vector.shape_cast %50 : vector<1x32x32xbf16> to vector<32x32xbf16>
    %cst_32 = arith.constant dense<0.000000e+00> : vector<8x32xf32>
    %52 = tpu.matmul %48, %51, %cst_32 {dimension_numbers = #tpu.dot_dimension_numbers<[1], [0], [0], [1], [0, 0, 1, 1], [], []>} : vector<8x32xbf16>, vector<32x32xbf16>, vector<8x32xf32> -> vector<8x32xf32>
    %53 = arith.addf %47, %52 : vector<8x32xf32>
    %54 = arith.index_cast %arg1 : i32 to index
    %c0_33 = arith.constant 0 : index
    %c0_34 = arith.constant 0 : index
    %55 = vector.load %arg13[%54, %c0_33, %c0_34] : memref<2x1x32xbf16, #tpu.memory_space<vmem>>, vector<1x1x32xbf16>
    %56 = vector.shape_cast %55 : vector<1x1x32xbf16> to vector<1x32xbf16>
    %57 = arith.extf %56 : vector<1x32xbf16> to vector<1x32xf32>
    %58 = vector.broadcast %57 : vector<1x32xf32> to vector<8x32xf32>
    %59 = arith.addf %53, %58 : vector<8x32xf32>
    %c0_i32 = arith.constant 0 : i32
    %60 = arith.cmpi eq, %arg1, %c0_i32 : i32
    %61 = arith.extui %60 : i1 to i32
    %c0_i32_35 = arith.constant 0 : i32
    %62 = arith.cmpi ne, %61, %c0_i32_35 : i32
    scf.if %62 {
      %cst_54 = arith.constant 0.000000e+00 : f32
      %90 = vector.broadcast %cst_54 : f32 to vector<8x32xf32>
      %c0_55 = arith.constant 0 : index
      %c0_56 = arith.constant 0 : index
      %91 = vector.load %arg18[%c0_55, %c0_56] : memref<8x32xf32, #tpu.memory_space<vmem>>, vector<8x32xf32>
      tpu.vector_store %arg18[%c0_55, %c0_56], %90 {strides = array<i32>} : memref<8x32xf32, #tpu.memory_space<vmem>>, vector<8x32xf32>,
    } else {
    }
    %c0_36 = arith.constant 0 : index
    %c0_37 = arith.constant 0 : index
    %63 = vector.load %arg18[%c0_36, %c0_37] : memref<8x32xf32, #tpu.memory_space<vmem>>, vector<8x32xf32>
    %64 = arith.addf %63, %59 : vector<8x32xf32>
    %c0_38 = arith.constant 0 : index
    %c0_39 = arith.constant 0 : index
    %65 = vector.load %arg18[%c0_38, %c0_39] : memref<8x32xf32, #tpu.memory_space<vmem>>, vector<8x32xf32>
    tpu.vector_store %arg18[%c0_38, %c0_39], %64 {strides = array<i32>} : memref<8x32xf32, #tpu.memory_space<vmem>>, vector<8x32xf32>,
    %66 = arith.index_cast %arg1 : i32 to index
    %c0_40 = arith.constant 0 : index
    %c0_41 = arith.constant 0 : index
    %67 = vector.load %arg14[%66, %c0_40, %c0_41] : memref<2x128x128xbf16, #tpu.memory_space<vmem>>, vector<1x128x128xbf16>
    %68 = vector.shape_cast %67 : vector<1x128x128xbf16> to vector<128x128xbf16>
    %cst_42 = arith.constant dense<0.000000e+00> : vector<8x128xf32>
    %69 = tpu.matmul %2, %68, %cst_42 {dimension_numbers = #tpu.dot_dimension_numbers<[1], [0], [0], [1], [0, 0, 1, 1], [], []>} : vector<8x128xbf16>, vector<128x128xbf16>, vector<8x128xf32> -> vector<8x128xf32>
    %70 = arith.index_cast %arg1 : i32 to index
    %c0_43 = arith.constant 0 : index
    %c0_44 = arith.constant 0 : index
    %71 = vector.load %arg15[%70, %c0_43, %c0_44] : memref<2x128x128xbf16, #tpu.memory_space<vmem>>, vector<1x128x128xbf16>
    %72 = vector.shape_cast %71 : vector<1x128x128xbf16> to vector<128x128xbf16>
    %cst_45 = arith.constant dense<0.000000e+00> : vector<8x128xf32>
    %73 = tpu.matmul %4, %72, %cst_45 {dimension_numbers = #tpu.dot_dimension_numbers<[1], [0], [0], [1], [0, 0, 1, 1], [], []>} : vector<8x128xbf16>, vector<128x128xbf16>, vector<8x128xf32> -> vector<8x128xf32>
    %74 = arith.addf %69, %73 : vector<8x128xf32>
    %75 = arith.index_cast %arg1 : i32 to index
    %c0_46 = arith.constant 0 : index
    %c0_47 = arith.constant 0 : index
    %76 = vector.load %arg16[%75, %c0_46, %c0_47] : memref<2x32x128xbf16, #tpu.memory_space<vmem>>, vector<1x32x128xbf16>
    %77 = vector.shape_cast %76 : vector<1x32x128xbf16> to vector<32x128xbf16>
    %cst_48 = arith.constant dense<0.000000e+00> : vector<8x128xf32>
    %78 = tpu.matmul %0, %77, %cst_48 {dimension_numbers = #tpu.dot_dimension_numbers<[1], [0], [0], [1], [0, 0, 1, 1], [], []>} : vector<8x32xbf16>, vector<32x128xbf16>, vector<8x128xf32> -> vector<8x128xf32>
    %79 = arith.addf %74, %78 : vector<8x128xf32>
    %80 = arith.index_cast %arg1 : i32 to index
    %c0_49 = arith.constant 0 : index
    %c0_50 = arith.constant 0 : index
    %81 = vector.load %arg17[%80, %c0_49, %c0_50] : memref<2x1x128xbf16, #tpu.memory_space<vmem>>, vector<1x1x128xbf16>
    %82 = vector.shape_cast %81 : vector<1x1x128xbf16> to vector<1x128xbf16>
    %83 = arith.extf %82 : vector<1x128xbf16> to vector<1x128xf32>
    %84 = vector.broadcast %83 : vector<1x128xf32> to vector<8x128xf32>
    %85 = arith.addf %79, %84 : vector<8x128xf32>
    %86 = arith.truncf %85 : vector<8x128xf32> to vector<8x128xbf16>
    %c0_51 = arith.constant 0 : index
    %c0_52 = arith.constant 0 : index
    %c0_53 = arith.constant 0 : index
    %87 = vector.load %arg19[%c0_51, %c0_52, %c0_53] : memref<1x8x128xbf16, #tpu.memory_space<vmem>>, vector<1x8x128xbf16>
    %88 = vector.shape_cast %87 : vector<1x8x128xbf16> to vector<8x128xbf16>
    %89 = vector.shape_cast %86 : vector<8x128xbf16> to vector<1x8x128xbf16>
    tpu.vector_store %arg19[%c0_51, %c0_52, %c0_53], %89 {strides = array<i32>} : memref<1x8x128xbf16, #tpu.memory_space<vmem>>, vector<1x8x128xbf16>,
    return
  }
  func.func @transform_0(%arg0: i32, %arg1: i32) -> (i32, i32) {
    %c0_i32 = arith.constant 0 : i32
    %c0_i32_0 = arith.constant 0 : i32
    %c0_i32_1 = arith.constant 0 : i32
    return %c0_i32, %c0_i32_0 : i32, i32
  }
  func.func @transform_1(%arg0: i32, %arg1: i32) -> (i32, i32) {
    %c0_i32 = arith.constant 0 : i32
    %c0_i32_0 = arith.constant 0 : i32
    %c0_i32_1 = arith.constant 0 : i32
    return %c0_i32, %c0_i32_0 : i32, i32
  }
  func.func @transform_2(%arg0: i32, %arg1: i32) -> (i32, i32) {
    %c0_i32 = arith.constant 0 : i32
    %c0_i32_0 = arith.constant 0 : i32
    return %arg0, %c0_i32 : i32, i32
  }
  func.func @transform_3(%arg0: i32, %arg1: i32) -> (i32, i32, i32) {
    %c0_i32 = arith.constant 0 : i32
    %c0_i32_0 = arith.constant 0 : i32
    return %arg1, %arg0, %c0_i32 : i32, i32, i32
  }
  func.func @transform_4(%arg0: i32, %arg1: i32) -> (i32, i32, i32) {
    %c0_i32 = arith.constant 0 : i32
    %c0_i32_0 = arith.constant 0 : i32
    return %arg1, %arg0, %c0_i32 : i32, i32, i32
  }
  func.func @transform_5(%arg0: i32, %arg1: i32) -> (i32, i32, i32) {
    %c0_i32 = arith.constant 0 : i32
    %c0_i32_0 = arith.constant 0 : i32
    %c0_i32_1 = arith.constant 0 : i32
    %c0_i32_2 = arith.constant 0 : i32
    return %c0_i32, %c0_i32_0, %c0_i32_1 : i32, i32, i32
  }
  func.func @transform_6(%arg0: i32, %arg1: i32) -> (i32, i32, i32) {
    %c0_i32 = arith.constant 0 : i32
    %c0_i32_0 = arith.constant 0 : i32
    %c0_i32_1 = arith.constant 0 : i32
    %c0_i32_2 = arith.constant 0 : i32
    return %c0_i32, %c0_i32_0, %c0_i32_1 : i32, i32, i32
  }
  func.func @transform_7(%arg0: i32, %arg1: i32) -> (i32, i32, i32) {
    %c0_i32 = arith.constant 0 : i32
    %c0_i32_0 = arith.constant 0 : i32
    %c0_i32_1 = arith.constant 0 : i32
    %c0_i32_2 = arith.constant 0 : i32
    return %c0_i32, %c0_i32_0, %c0_i32_1 : i32, i32, i32
  }
  func.func @transform_8(%arg0: i32, %arg1: i32) -> (i32, i32, i32) {
    %c0_i32 = arith.constant 0 : i32
    %c0_i32_0 = arith.constant 0 : i32
    %c0_i32_1 = arith.constant 0 : i32
    %c0_i32_2 = arith.constant 0 : i32
    return %c0_i32, %c0_i32_0, %c0_i32_1 : i32, i32, i32
  }
  func.func @transform_9(%arg0: i32, %arg1: i32) -> (i32, i32, i32) {
    %c0_i32 = arith.constant 0 : i32
    %c0_i32_0 = arith.constant 0 : i32
    %c0_i32_1 = arith.constant 0 : i32
    %c0_i32_2 = arith.constant 0 : i32
    return %c0_i32, %c0_i32_0, %c0_i32_1 : i32, i32, i32
  }
  func.func @transform_10(%arg0: i32, %arg1: i32) -> (i32, i32, i32) {
    %c0_i32 = arith.constant 0 : i32
    %c0_i32_0 = arith.constant 0 : i32
    %c0_i32_1 = arith.constant 0 : i32
    %c0_i32_2 = arith.constant 0 : i32
    return %c0_i32, %c0_i32_0, %c0_i32_1 : i32, i32, i32
  }
  func.func @transform_11(%arg0: i32, %arg1: i32) -> (i32, i32, i32) {
    %c0_i32 = arith.constant 0 : i32
    %c0_i32_0 = arith.constant 0 : i32
    %c0_i32_1 = arith.constant 0 : i32
    %c0_i32_2 = arith.constant 0 : i32
    return %c0_i32, %c0_i32_0, %c0_i32_1 : i32, i32, i32
  }
  func.func @transform_12(%arg0: i32, %arg1: i32) -> (i32, i32, i32) {
    %c0_i32 = arith.constant 0 : i32
    %c0_i32_0 = arith.constant 0 : i32
    %c0_i32_1 = arith.constant 0 : i32
    %c0_i32_2 = arith.constant 0 : i32
    return %c0_i32, %c0_i32_0, %c0_i32_1 : i32, i32, i32
  }
  func.func @transform_13(%arg0: i32, %arg1: i32) -> (i32, i32, i32) {
    %c0_i32 = arith.constant 0 : i32
    %c0_i32_0 = arith.constant 0 : i32
    %c0_i32_1 = arith.constant 0 : i32
    %c0_i32_2 = arith.constant 0 : i32
    return %c0_i32, %c0_i32_0, %c0_i32_1 : i32, i32, i32
  }
  func.func @transform_14(%arg0: i32, %arg1: i32) -> (i32, i32, i32) {
    %c0_i32 = arith.constant 0 : i32
    %c0_i32_0 = arith.constant 0 : i32
    %c0_i32_1 = arith.constant 0 : i32
    %c0_i32_2 = arith.constant 0 : i32
    return %c0_i32, %c0_i32_0, %c0_i32_1 : i32, i32, i32
  }
  func.func @transform_15(%arg0: i32, %arg1: i32) -> (i32, i32, i32) {
    %c0_i32 = arith.constant 0 : i32
    %c0_i32_0 = arith.constant 0 : i32
    %c0_i32_1 = arith.constant 0 : i32
    %c0_i32_2 = arith.constant 0 : i32
    return %c0_i32, %c0_i32_0, %c0_i32_1 : i32, i32, i32
  }
  func.func @transform_16(%arg0: i32, %arg1: i32) -> (i32, i32) {
    %c0_i32 = arith.constant 0 : i32
    %c0_i32_0 = arith.constant 0 : i32
    return %arg0, %c0_i32 : i32, i32
  }
  func.func @transform_17(%arg0: i32, %arg1: i32) -> (i32, i32, i32) {
    %c0_i32 = arith.constant 0 : i32
    %c0_i32_0 = arith.constant 0 : i32
    return %arg1, %arg0, %c0_i32 : i32, i32, i32
  }
}

</mosaic_0001>

<llo_original>
// kernel: hetero_conv.1
$region0: #{hetero_conv.1}
  #allocation0 [shape = 'u32[]', space=smem, size = 0x4, offset = 0x4, fixed_abs, tag = 'smem constant byte address 0x4 - core index']
  #allocation1 [shape = 'u32[144,128]{1,0:T(1,128)}', space=vmem, size = 0x12000, scoped, tag = 'internal scratch']
  %s0 = inlined_call_operand.hbm [shape: f32[128,4], index: 0, kind: input, shape index: {}]
  %s1 = inlined_call_operand.hbm [shape: f32[4,128], index: 1, kind: input, shape index: {}]
  %s2 = inlined_call_operand.hbm [shape: bf16[16,32], index: 2, kind: input, shape index: {}]
  %s3 = inlined_call_operand.hbm [shape: bf16[2,16,128], index: 3, kind: input, shape index: {}]
  %s4 = inlined_call_operand.hbm [shape: bf16[2,16,128], index: 4, kind: input, shape index: {}]
  %s5 = inlined_call_operand.hbm [shape: bf16[2,32,128], index: 5, kind: input, shape index: {}]
  %s6 = inlined_call_operand.hbm [shape: bf16[2,32,64], index: 6, kind: input, shape index: {}]
  %s7 = inlined_call_operand.hbm [shape: bf16[2,128,64], index: 7, kind: input, shape index: {}]
  %s8 = inlined_call_operand.hbm [shape: bf16[2,64,32], index: 8, kind: input, shape index: {}]
  %s9 = inlined_call_operand.hbm [shape: bf16[2,32,32], index: 9, kind: input, shape index: {}]
  %s10 = inlined_call_operand.hbm [shape: bf16[2,32,32], index: 10, kind: input, shape index: {}]
  %s11 = inlined_call_operand.hbm [shape: bf16[2,1,32], index: 11, kind: input, shape index: {}]
  %s12 = inlined_call_operand.hbm [shape: bf16[2,128,128], index: 12, kind: input, shape index: {}]
  %s13 = inlined_call_operand.hbm [shape: bf16[2,128,128], index: 13, kind: input, shape index: {}]
  %s14 = inlined_call_operand.hbm [shape: bf16[2,32,128], index: 14, kind: input, shape index: {}]
  %s15 = inlined_call_operand.hbm [shape: bf16[2,1,128], index: 15, kind: input, shape index: {}]
  %s16 = inlined_call_operand.hbm [shape: f32[16,32], index: 16, kind: output, shape index: {0}]
  %s17 = inlined_call_operand.hbm [shape: bf16[2,16,128], index: 17, kind: output, shape index: {1}]
  %18 = xla_tuple %s16, %s17
  %s19 = sld [smem:[#allocation0]]
  $region173: #{hetero_conv.1} parent=0
    _
  %s21 = ssub.s32 1, %s19
  %s22 = scalar_select 0, %s21, %s19
  $region1: #{hetero_conv.1} parent=0
    #allocation2 [shape = 'u8[65536]{0}', space=vmem, size = 0x10000, scoped, tag = 'input window, operand 0, single buffered']
    #allocation3 [shape = 's32[2]{0}', space=sflag, size = 0x8, scoped, tag = 'scoped memory for hetero_conv.1']
    #allocation4 [shape = 's32[2]{0}', space=sflag, size = 0x8, scoped, tag = 'scoped memory for hetero_conv.1']
    #allocation5 [shape = 'u8[2048]{0}', space=vmem, size = 0x800, scoped, tag = 'input window, operand 1, single buffered']
    #allocation6 [shape = 's32[1]{0}', space=sflag, size = 0x4, scoped, tag = 'scoped memory for hetero_conv.1']
    #allocation7 [shape = 'u8[4096]{0}', space=vmem, size = 0x1000, scoped, tag = 'input window, operand 2']
    #allocation8 [shape = 'u8[4096]{0}', space=vmem, size = 0x1000, scoped, tag = 'input window, operand 3']
    #allocation9 [shape = 'u8[4096]{0}', space=vmem, size = 0x1000, scoped, tag = 'input window, operand 4']
    #allocation10 [shape = 'u8[16384]{0}', space=vmem, size = 0x4000, scoped, tag = 'input window, operand 5, single buffered']
    #allocation11 [shape = 'u8[16384]{0}', space=vmem, size = 0x4000, scoped, tag = 'input window, operand 6, single buffered']
    #allocation12 [shape = 's32[1]{0}', space=sflag, size = 0x4, scoped, tag = 'scoped memory for hetero_conv.1']
    #allocation13 [shape = 'u8[65536]{0}', space=vmem, size = 0x10000, scoped, tag = 'input window, operand 7, single buffered']
    #allocation14 [shape = 'u8[32768]{0}', space=vmem, size = 0x8000, scoped, tag = 'input window, operand 8, single buffered']
    #allocation15 [shape = 's32[1]{0}', space=sflag, size = 0x4, scoped, tag = 'scoped memory for hetero_conv.1']
    #allocation16 [shape = 'u8[16384]{0}', space=vmem, size = 0x4000, scoped, tag = 'input window, operand 9, single buffered']
    #allocation17 [shape = 'u8[16384]{0}', space=vmem, size = 0x4000, scoped, tag = 'input window, operand 10, single buffered']
    #allocation18 [shape = 's32[1]{0}', space=sflag, size = 0x4, scoped, tag = 'scoped memory for hetero_conv.1']
    #allocation19 [shape = 'u8[1024]{0}', space=vmem, size = 0x400, scoped, tag = 'input window, operand 11, single buffered']
    #allocation20 [shape = 'u8[65536]{0}', space=vmem, size = 0x10000, scoped, tag = 'input window, operand 12, single buffered']
    #allocation21 [shape = 's32[1]{0}', space=sflag, size = 0x4, scoped, tag = 'scoped memory for hetero_conv.1']
    #allocation22 [shape = 'u8[65536]{0}', space=vmem, size = 0x10000, scoped, tag = 'input window, operand 13, single buffered']
    #allocation23 [shape = 'u8[16384]{0}', space=vmem, size = 0x4000, scoped, tag = 'input window, operand 14, single buffered']
    #allocation24 [shape = 's32[1]{0}', space=sflag, size = 0x4, scoped, tag = 'scoped memory for hetero_conv.1']
    #allocation25 [shape = 'u8[1024]{0}', space=vmem, size = 0x400, scoped, tag = 'input window, operand 15, single buffered']
    #allocation26 [shape = 'u8[8192]{0}', space=vmem, size = 0x2000, scoped, tag = 'output window, operand 0']
    #allocation27 [shape = 'u8[4096]{0}', space=vmem, size = 0x1000, scoped, tag = 'output window, operand 1']
    #allocation28 [shape = 's32[2]{0}', space=sflag, size = 0x8, scoped, tag = 'scoped memory for hetero_conv.1']
    %23 = vsyncpa [#allocation3], 0
    %24 = vsyncpa [#allocation6], 0
    %25 = vsyncpa [#allocation12], 0
    %26 = vsyncpa [#allocation15], 0
    %27 = vsyncpa [#allocation18], 0
    %28 = vsyncpa [#allocation21], 0
    %29 = vsyncpa [#allocation24], 0
    %30 = vsyncpa [#allocation4], 0
    %s31 = scalar_lea.sflag [#allocation4], 1
    %32 = vsyncpa %s31, 0
    %33 = vsyncpa [#allocation28], 0
    %s34 = scalar_lea.sflag [#allocation28], 1
    %35 = vsyncpa %s34, 0
    loop: start=0, step=1, limit=6
    $region2: #{hetero_conv.1} parent=1 // loop_pre_header
      _
    $region3: #{hetero_conv.1} parent=1 // loop_header
      %s37 = sphi 0, %s41
      %p38 = scmp.ge.s32.totalorder %s37, 6
      %s44 = sphi 0, %s56
      %s45 = sphi 0, %s52
      %s46 = sphi 0, %s44
      %s47 = sphi 0, %s45
      %s48 = sphi 0, %s46
      %s49 = sphi 0, %s47
      %s57 = sphi 0, %s57
      %s59 = sphi 0, %s57
      %s60 = sphi 0, %s59
      %s74 = sphi 0, %s60
      %s78 = sphi 0, %s78
      %s80 = sphi 0, %s78
      %s81 = sphi 0, %s80
      %s95 = sphi 0, %s81
      %s101 = sphi 0, %s103
      %s104 = sphi 0, %s101
      %s105 = sphi 0, %s104
      %s121 = sphi 0, %s105
      %s129 = sphi 0, %s131
      %s132 = sphi 0, %s129
      %s133 = sphi 0, %s132
      %s149 = sphi 0, %s133
      %s157 = sphi 0, %s159
      %s160 = sphi 0, %s157
      %s161 = sphi 0, %s160
      %s177 = sphi 0, %s161
      %s181 = sphi 0, %s181
      %s183 = sphi 0, %s181
      %s184 = sphi 0, %s183
      %s198 = sphi 0, %s184
      %s202 = sphi 0, %s202
      %s204 = sphi 0, %s202
      %s205 = sphi 0, %s204
      %s219 = sphi 0, %s205
      %s223 = sphi 0, %s223
      %s225 = sphi 0, %s223
      %s226 = sphi 0, %s225
      %s240 = sphi 0, %s226
      %s244 = sphi 0, %s244
      %s246 = sphi 0, %s244
      %s247 = sphi 0, %s246
      %s261 = sphi 0, %s247
      %s265 = sphi 0, %s265
      %s267 = sphi 0, %s265
      %s268 = sphi 0, %s267
      %s282 = sphi 0, %s268
      %s286 = sphi 0, %s286
      %s288 = sphi 0, %s286
      %s289 = sphi 0, %s288
      %s303 = sphi 0, %s289
      %s307 = sphi 0, %s307
      %s309 = sphi 0, %s307
      %s310 = sphi 0, %s309
      %s324 = sphi 0, %s310
      %s328 = sphi 0, %s328
      %s330 = sphi 0, %s328
      %s331 = sphi 0, %s330
      %s345 = sphi 0, %s331
      %s349 = sphi 0, %s349
      %s351 = sphi 0, %s349
      %s352 = sphi 0, %s351
      %s366 = sphi 0, %s352
      %s370 = sphi 0, %s370
      %s372 = sphi 0, %s370
      %s373 = sphi 0, %s372
      %s387 = sphi 0, %s373
      %s391 = sphi 0, %s391
      %s393 = sphi 0, %s391
      %s394 = sphi 0, %s393
      %s408 = sphi 0, %s394
      %s414 = sphi 0, %s416
      %s417 = sphi 0, %s414
      %s418 = sphi 0, %s417
      %s434 = sphi 0, %s418
      %s442 = sphi 0, %s444
      %s445 = sphi 0, %s442
      %s446 = sphi 0, %s445
      %s462 = sphi 0, %s446
    $region4: #{hetero_conv.1} parent=1 // loop_header_branch
      %40 = sbr.rel (%p38) target = $region8
    $region5: #{hetero_conv.1} parent=1 // loop_body
      %s42 = ssub.s32 %s37, 1
      %s43 = ssub.s32 %s37, 2
      %s50 = sadd.s32 1, %s45
      %p51 = scmp.ge.s32.totalorder %s50, 2
      %s52 = scalar_select %p51, 0, %s50
      %s53 = sadd.s32 1, %s44
      %s54 = scalar_select %p51, %s53, %s44
      %p55 = scmp.ge.s32.totalorder %s54, 2
      %s56 = scalar_select %p55, 0, %s54
      %s58 = sadd.s32 %s57, 1
      %p61 = scmp.eq.s32.totalorder %s37, 3
      %p62 = scmp.ne.s32.totalorder %s57, %s59
      %p63 = scmp.eq.s32.totalorder %s37, 0
      %p64 = por %p62, %p63
      %p65 = scmp.ne.s32.totalorder %s57, %s59
      %p66 = scmp.eq.s32.totalorder %s42, 3
      %p67 = por %p65, %p66
      %p68 = scmp.ne.s32.totalorder %s59, %s60
      %p69 = scmp.eq.s32.totalorder %s42, 0
      %p70 = por %p68, %p69
      %p71 = scmp.ne.s32.totalorder %s59, %s60
      %p72 = scmp.eq.s32.totalorder %s43, 3
      %p73 = por %p71, %p72
      %p75 = scmp.ne.s32.totalorder %s60, %s74
      %p76 = scmp.eq.s32.totalorder %s43, 0
      %p77 = por %p75, %p76
      %s79 = sadd.s32 %s78, 1
      %p82 = scmp.eq.s32.totalorder %s37, 3
      %p83 = scmp.ne.s32.totalorder %s78, %s80
      %p84 = scmp.eq.s32.totalorder %s37, 0
      %p85 = por %p83, %p84
      %p86 = scmp.ne.s32.totalorder %s78, %s80
      %p87 = scmp.eq.s32.totalorder %s42, 3
      %p88 = por %p86, %p87
      %p89 = scmp.ne.s32.totalorder %s80, %s81
      %p90 = scmp.eq.s32.totalorder %s42, 0
      %p91 = por %p89, %p90
      %p92 = scmp.ne.s32.totalorder %s80, %s81
      %p93 = scmp.eq.s32.totalorder %s43, 3
      %p94 = por %p92, %p93
      %p96 = scmp.ne.s32.totalorder %s81, %s95
      %p97 = scmp.eq.s32.totalorder %s43, 0
      %p98 = por %p96, %p97
      %s99 = ssub.s32 %s44, %s56
      %p100 = scmp.eq.s32.totalorder %s99, 0
      %s102 = sadd.s32 %s101, 1
      %s103 = scalar_select %p100, %s101, %s102
      %p106 = pneg %p100
      %p107 = scmp.eq.s32.totalorder %s37, 3
      %p108 = por %p106, %p107
      %p109 = scmp.ne.s32.totalorder %s101, %s104
      %p110 = scmp.eq.s32.totalorder %s37, 0
      %p111 = por %p109, %p110
      %p112 = scmp.ne.s32.totalorder %s101, %s104
      %p113 = scmp.eq.s32.totalorder %s42, 3
      %p114 = por %p112, %p113
      %p115 = scmp.ne.s32.totalorder %s104, %s105
      %p116 = scmp.eq.s32.totalorder %s42, 0
      %p117 = por %p115, %p116
      %p118 = scmp.ne.s32.totalorder %s104, %s105
      %p119 = scmp.eq.s32.totalorder %s43, 3
      %p120 = por %p118, %p119
      %p122 = scmp.ne.s32.totalorder %s105, %s121
      %p123 = scmp.eq.s32.totalorder %s43, 0
      %p124 = por %p122, %p123
      %s125 = ssub.s32 %s45, %s52
      %s126 = ssub.s32 %s44, %s56
      %s127 = sor.u32 %s125, %s126
      %p128 = scmp.eq.s32.totalorder %s127, 0
      %s130 = sadd.s32 %s129, 1
      %s131 = scalar_select %p128, %s129, %s130
      %p134 = pneg %p128
      %p135 = scmp.eq.s32.totalorder %s37, 3
      %p136 = por %p134, %p135
      %p137 = scmp.ne.s32.totalorder %s129, %s132
      %p138 = scmp.eq.s32.totalorder %s37, 0
      %p139 = por %p137, %p138
      %p140 = scmp.ne.s32.totalorder %s129, %s132
      %p141 = scmp.eq.s32.totalorder %s42, 3
      %p142 = por %p140, %p141
      %p143 = scmp.ne.s32.totalorder %s132, %s133
      %p144 = scmp.eq.s32.totalorder %s42, 0
      %p145 = por %p143, %p144
      %p146 = scmp.ne.s32.totalorder %s132, %s133
      %p147 = scmp.eq.s32.totalorder %s43, 3
      %p148 = por %p146, %p147
      %p150 = scmp.ne.s32.totalorder %s133, %s149
      %p151 = scmp.eq.s32.totalorder %s43, 0
      %p152 = por %p150, %p151
      %s153 = ssub.s32 %s45, %s52
      %s154 = ssub.s32 %s44, %s56
      %s155 = sor.u32 %s153, %s154
      %p156 = scmp.eq.s32.totalorder %s155, 0
      %s158 = sadd.s32 %s157, 1
      %s159 = scalar_select %p156, %s157, %s158
      %p162 = pneg %p156
      %p163 = scmp.eq.s32.totalorder %s37, 3
      %p164 = por %p162, %p163
      %p165 = scmp.ne.s32.totalorder %s157, %s160
      %p166 = scmp.eq.s32.totalorder %s37, 0
      %p167 = por %p165, %p166
      %p168 = scmp.ne.s32.totalorder %s157, %s160
      %p169 = scmp.eq.s32.totalorder %s42, 3
      %p170 = por %p168, %p169
      %p171 = scmp.ne.s32.totalorder %s160, %s161
      %p172 = scmp.eq.s32.totalorder %s42, 0
      %p173 = por %p171, %p172
      %p174 = scmp.ne.s32.totalorder %s160, %s161
      %p175 = scmp.eq.s32.totalorder %s43, 3
      %p176 = por %p174, %p175
      %p178 = scmp.ne.s32.totalorder %s161, %s177
      %p179 = scmp.eq.s32.totalorder %s43, 0
      %p180 = por %p178, %p179
      %s182 = sadd.s32 %s181, 1
      %p185 = scmp.eq.s32.totalorder %s37, 3
      %p186 = scmp.ne.s32.totalorder %s181, %s183
      %p187 = scmp.eq.s32.totalorder %s37, 0
      %p188 = por %p186, %p187
      %p189 = scmp.ne.s32.totalorder %s181, %s183
      %p190 = scmp.eq.s32.totalorder %s42, 3
      %p191 = por %p189, %p190
      %p192 = scmp.ne.s32.totalorder %s183, %s184
      %p193 = scmp.eq.s32.totalorder %s42, 0
      %p194 = por %p192, %p193
      %p195 = scmp.ne.s32.totalorder %s183, %s184
      %p196 = scmp.eq.s32.totalorder %s43, 3
      %p197 = por %p195, %p196
      %p199 = scmp.ne.s32.totalorder %s184, %s198
      %p200 = scmp.eq.s32.totalorder %s43, 0
      %p201 = por %p199, %p200
      %s203 = sadd.s32 %s202, 1
      %p206 = scmp.eq.s32.totalorder %s37, 3
      %p207 = scmp.ne.s32.totalorder %s202, %s204
      %p208 = scmp.eq.s32.totalorder %s37, 0
      %p209 = por %p207, %p208
      %p210 = scmp.ne.s32.totalorder %s202, %s204
      %p211 = scmp.eq.s32.totalorder %s42, 3
      %p212 = por %p210, %p211
      %p213 = scmp.ne.s32.totalorder %s204, %s205
      %p214 = scmp.eq.s32.totalorder %s42, 0
      %p215 = por %p213, %p214
      %p216 = scmp.ne.s32.totalorder %s204, %s205
      %p217 = scmp.eq.s32.totalorder %s43, 3
      %p218 = por %p216, %p217
      %p220 = scmp.ne.s32.totalorder %s205, %s219
      %p221 = scmp.eq.s32.totalorder %s43, 0
      %p222 = por %p220, %p221
      %s224 = sadd.s32 %s223, 1
      %p227 = scmp.eq.s32.totalorder %s37, 3
      %p228 = scmp.ne.s32.totalorder %s223, %s225
      %p229 = scmp.eq.s32.totalorder %s37, 0
      %p230 = por %p228, %p229
      %p231 = scmp.ne.s32.totalorder %s223, %s225
      %p232 = scmp.eq.s32.totalorder %s42, 3
      %p233 = por %p231, %p232
      %p234 = scmp.ne.s32.totalorder %s225, %s226
      %p235 = scmp.eq.s32.totalorder %s42, 0
      %p236 = por %p234, %p235
      %p237 = scmp.ne.s32.totalorder %s225, %s226
      %p238 = scmp.eq.s32.totalorder %s43, 3
      %p239 = por %p237, %p238
      %p241 = scmp.ne.s32.totalorder %s226, %s240
      %p242 = scmp.eq.s32.totalorder %s43, 0
      %p243 = por %p241, %p242
      %s245 = sadd.s32 %s244, 1
      %p248 = scmp.eq.s32.totalorder %s37, 3
      %p249 = scmp.ne.s32.totalorder %s244, %s246
      %p250 = scmp.eq.s32.totalorder %s37, 0
      %p251 = por %p249, %p250
      %p252 = scmp.ne.s32.totalorder %s244, %s246
      %p253 = scmp.eq.s32.totalorder %s42, 3
      %p254 = por %p252, %p253
      %p255 = scmp.ne.s32.totalorder %s246, %s247
      %p256 = scmp.eq.s32.totalorder %s42, 0
      %p257 = por %p255, %p256
      %p258 = scmp.ne.s32.totalorder %s246, %s247
      %p259 = scmp.eq.s32.totalorder %s43, 3
      %p260 = por %p258, %p259
      %p262 = scmp.ne.s32.totalorder %s247, %s261
      %p263 = scmp.eq.s32.totalorder %s43, 0
      %p264 = por %p262, %p263
      %s266 = sadd.s32 %s265, 1
      %p269 = scmp.eq.s32.totalorder %s37, 3
      %p270 = scmp.ne.s32.totalorder %s265, %s267
      %p271 = scmp.eq.s32.totalorder %s37, 0
      %p272 = por %p270, %p271
      %p273 = scmp.ne.s32.totalorder %s265, %s267
      %p274 = scmp.eq.s32.totalorder %s42, 3
      %p275 = por %p273, %p274
      %p276 = scmp.ne.s32.totalorder %s267, %s268
      %p277 = scmp.eq.s32.totalorder %s42, 0
      %p278 = por %p276, %p277
      %p279 = scmp.ne.s32.totalorder %s267, %s268
      %p280 = scmp.eq.s32.totalorder %s43, 3
      %p281 = por %p279, %p280
      %p283 = scmp.ne.s32.totalorder %s268, %s282
      %p284 = scmp.eq.s32.totalorder %s43, 0
      %p285 = por %p283, %p284
      %s287 = sadd.s32 %s286, 1
      %p290 = scmp.eq.s32.totalorder %s37, 3
      %p291 = scmp.ne.s32.totalorder %s286, %s288
      %p292 = scmp.eq.s32.totalorder %s37, 0
      %p293 = por %p291, %p292
      %p294 = scmp.ne.s32.totalorder %s286, %s288
      %p295 = scmp.eq.s32.totalorder %s42, 3
      %p296 = por %p294, %p295
      %p297 = scmp.ne.s32.totalorder %s288, %s289
      %p298 = scmp.eq.s32.totalorder %s42, 0
      %p299 = por %p297, %p298
      %p300 = scmp.ne.s32.totalorder %s288, %s289
      %p301 = scmp.eq.s32.totalorder %s43, 3
      %p302 = por %p300, %p301
      %p304 = scmp.ne.s32.totalorder %s289, %s303
      %p305 = scmp.eq.s32.totalorder %s43, 0
      %p306 = por %p304, %p305
      %s308 = sadd.s32 %s307, 1
      %p311 = scmp.eq.s32.totalorder %s37, 3
      %p312 = scmp.ne.s32.totalorder %s307, %s309
      %p313 = scmp.eq.s32.totalorder %s37, 0
      %p314 = por %p312, %p313
      %p315 = scmp.ne.s32.totalorder %s307, %s309
      %p316 = scmp.eq.s32.totalorder %s42, 3
      %p317 = por %p315, %p316
      %p318 = scmp.ne.s32.totalorder %s309, %s310
      %p319 = scmp.eq.s32.totalorder %s42, 0
      %p320 = por %p318, %p319
      %p321 = scmp.ne.s32.totalorder %s309, %s310
      %p322 = scmp.eq.s32.totalorder %s43, 3
      %p323 = por %p321, %p322
      %p325 = scmp.ne.s32.totalorder %s310, %s324
      %p326 = scmp.eq.s32.totalorder %s43, 0
      %p327 = por %p325, %p326
      %s329 = sadd.s32 %s328, 1
      %p332 = scmp.eq.s32.totalorder %s37, 3
      %p333 = scmp.ne.s32.totalorder %s328, %s330
      %p334 = scmp.eq.s32.totalorder %s37, 0
      %p335 = por %p333, %p334
      %p336 = scmp.ne.s32.totalorder %s328, %s330
      %p337 = scmp.eq.s32.totalorder %s42, 3
      %p338 = por %p336, %p337
      %p339 = scmp.ne.s32.totalorder %s330, %s331
      %p340 = scmp.eq.s32.totalorder %s42, 0
      %p341 = por %p339, %p340
      %p342 = scmp.ne.s32.totalorder %s330, %s331
      %p343 = scmp.eq.s32.totalorder %s43, 3
      %p344 = por %p342, %p343
      %p346 = scmp.ne.s32.totalorder %s331, %s345
      %p347 = scmp.eq.s32.totalorder %s43, 0
      %p348 = por %p346, %p347
      %s350 = sadd.s32 %s349, 1
      %p353 = scmp.eq.s32.totalorder %s37, 3
      %p354 = scmp.ne.s32.totalorder %s349, %s351
      %p355 = scmp.eq.s32.totalorder %s37, 0
      %p356 = por %p354, %p355
      %p357 = scmp.ne.s32.totalorder %s349, %s351
      %p358 = scmp.eq.s32.totalorder %s42, 3
      %p359 = por %p357, %p358
      %p360 = scmp.ne.s32.totalorder %s351, %s352
      %p361 = scmp.eq.s32.totalorder %s42, 0
      %p362 = por %p360, %p361
      %p363 = scmp.ne.s32.totalorder %s351, %s352
      %p364 = scmp.eq.s32.totalorder %s43, 3
      %p365 = por %p363, %p364
      %p367 = scmp.ne.s32.totalorder %s352, %s366
      %p368 = scmp.eq.s32.totalorder %s43, 0
      %p369 = por %p367, %p368
      %s371 = sadd.s32 %s370, 1
      %p374 = scmp.eq.s32.totalorder %s37, 3
      %p375 = scmp.ne.s32.totalorder %s370, %s372
      %p376 = scmp.eq.s32.totalorder %s37, 0
      %p377 = por %p375, %p376
      %p378 = scmp.ne.s32.totalorder %s370, %s372
      %p379 = scmp.eq.s32.totalorder %s42, 3
      %p380 = por %p378, %p379
      %p381 = scmp.ne.s32.totalorder %s372, %s373
      %p382 = scmp.eq.s32.totalorder %s42, 0
      %p383 = por %p381, %p382
      %p384 = scmp.ne.s32.totalorder %s372, %s373
      %p385 = scmp.eq.s32.totalorder %s43, 3
      %p386 = por %p384, %p385
      %p388 = scmp.ne.s32.totalorder %s373, %s387
      %p389 = scmp.eq.s32.totalorder %s43, 0
      %p390 = por %p388, %p389
      %s392 = sadd.s32 %s391, 1
      %p395 = scmp.eq.s32.totalorder %s37, 3
      %p396 = scmp.ne.s32.totalorder %s391, %s393
      %p397 = scmp.eq.s32.totalorder %s37, 0
      %p398 = por %p396, %p397
      %p399 = scmp.ne.s32.totalorder %s391, %s393
      %p400 = scmp.eq.s32.totalorder %s42, 3
      %p401 = por %p399, %p400
      %p402 = scmp.ne.s32.totalorder %s393, %s394
      %p403 = scmp.eq.s32.totalorder %s42, 0
      %p404 = por %p402, %p403
      %p405 = scmp.ne.s32.totalorder %s393, %s394
      %p406 = scmp.eq.s32.totalorder %s43, 3
      %p407 = por %p405, %p406
      %p409 = scmp.ne.s32.totalorder %s394, %s408
      %p410 = scmp.eq.s32.totalorder %s43, 0
      %p411 = por %p409, %p410
      %s412 = ssub.s32 %s44, %s56
      %p413 = scmp.eq.s32.totalorder %s412, 0
      %s415 = sadd.s32 %s414, 1
      %s416 = scalar_select %p413, %s414, %s415
      %p419 = pneg %p413
      %p420 = scmp.eq.s32.totalorder %s37, 3
      %p421 = por %p419, %p420
      %p422 = scmp.ne.s32.totalorder %s414, %s417
      %p423 = scmp.eq.s32.totalorder %s37, 0
      %p424 = por %p422, %p423
      %p425 = scmp.ne.s32.totalorder %s414, %s417
      %p426 = scmp.eq.s32.totalorder %s42, 3
      %p427 = por %p425, %p426
      %p428 = scmp.ne.s32.totalorder %s417, %s418
      %p429 = scmp.eq.s32.totalorder %s42, 0
      %p430 = por %p428, %p429
      %p431 = scmp.ne.s32.totalorder %s417, %s418
      %p432 = scmp.eq.s32.totalorder %s43, 3
      %p433 = por %p431, %p432
      %p435 = scmp.ne.s32.totalorder %s418, %s434
      %p436 = scmp.eq.s32.totalorder %s43, 0
      %p437 = por %p435, %p436
      %s438 = ssub.s32 %s45, %s52
      %s439 = ssub.s32 %s44, %s56
      %s440 = sor.u32 %s438, %s439
      %p441 = scmp.eq.s32.totalorder %s440, 0
      %s443 = sadd.s32 %s442, 1
      %s444 = scalar_select %p441, %s442, %s443
      %p447 = pneg %p441
      %p448 = scmp.eq.s32.totalorder %s37, 3
      %p449 = por %p447, %p448
      %p450 = scmp.ne.s32.totalorder %s442, %s445
      %p451 = scmp.eq.s32.totalorder %s37, 0
      %p452 = por %p450, %p451
      %p453 = scmp.ne.s32.totalorder %s442, %s445
      %p454 = scmp.eq.s32.totalorder %s42, 3
      %p455 = por %p453, %p454
      %p456 = scmp.ne.s32.totalorder %s445, %s446
      %p457 = scmp.eq.s32.totalorder %s42, 0
      %p458 = por %p456, %p457
      %p459 = scmp.ne.s32.totalorder %s445, %s446
      %p460 = scmp.eq.s32.totalorder %s43, 3
      %p461 = por %p459, %p460
      %p463 = scmp.ne.s32.totalorder %s446, %s462
      %p464 = scmp.eq.s32.totalorder %s43, 0
      %p465 = por %p463, %p464
      %p466 = scmp.le.s32.totalorder 1, %s37
      %p467 = scmp.lt.s32.totalorder %s37, 5
      %p468 = pnand %p466, %p467
      %p469 = pneg %p468
      // Predicated region
      $region9: #{hetero_conv.1} parent=5 // pred_check
        _
      $region10: #{hetero_conv.1} parent=5 // pred_check_branch
        %471 = sbr.rel (%p468) target = $region12
      $region11: #{hetero_conv.1} parent=5 // pred_region
        %s472 = ssub.s32 %s37, 1
        // Predicated region
        $region13: #{hetero_conv.1} parent=11 // pred_check
          %p473 = pneg %p70
        $region14: #{hetero_conv.1} parent=11 // pred_check_branch
          %475 = sbr.rel (%p473) target = $region16
        $region15: #{hetero_conv.1} parent=11 // pred_region
          %s477 = ssub.s32 2048, 2048
          %478 = vsyncadd [#allocation3], %s477
          %s479 = sshll.u32 [#allocation2], 4
          %s480 = int_to_ptr.vmem [resolvable:$true] %s479
          %485 = dma.hbm_to_vmem [thread:$0]  %s0, 2048, %s480, [#allocation3], 128, 128, 8
        $region16: #{hetero_conv.1} parent=11 // pred_fallthru
          _
        // Predicated region
        $region17: #{hetero_conv.1} parent=11 // pred_check
          %p486 = pneg %p91
        $region18: #{hetero_conv.1} parent=11 // pred_check_branch
          %488 = sbr.rel (%p486) target = $region20
        $region19: #{hetero_conv.1} parent=11 // pred_region
          %s490 = ssub.s32 64, 64
          %491 = vsyncadd [#allocation6], %s490
          %s493 = sshll.u32 [#allocation5], 4
          %s494 = int_to_ptr.vmem [resolvable:$true] %s493
          %496 = dma.hbm_to_vmem [thread:$0]  %s1, 64, %s494, [#allocation6]
        $region20: #{hetero_conv.1} parent=11 // pred_fallthru
          _
        // Predicated region
        $region21: #{hetero_conv.1} parent=11 // pred_check
          %p497 = pneg %p194
        $region22: #{hetero_conv.1} parent=11 // pred_check_branch
          %499 = sbr.rel (%p497) target = $region24
        $region23: #{hetero_conv.1} parent=11 // pred_region
          %s501 = ssub.s32 512, 512
          %502 = vsyncadd [#allocation6], %s501
          %s503 = sshll.u32 [#allocation10], 4
          %s504 = int_to_ptr.vmem [resolvable:$true] %s503
          %509 = dma.hbm_to_vmem [thread:$0]  %s5, 512, %s504, [#allocation6], 64, 64, 4
        $region24: #{hetero_conv.1} parent=11 // pred_fallthru
          _
        // Predicated region
        $region25: #{hetero_conv.1} parent=11 // pred_check
          %p510 = pneg %p215
        $region26: #{hetero_conv.1} parent=11 // pred_check_branch
          %512 = sbr.rel (%p510) target = $region28
        $region27: #{hetero_conv.1} parent=11 // pred_region
          %s514 = ssub.s32 512, 512
          %515 = vsyncadd [#allocation12], %s514
          %s516 = sshll.u32 [#allocation11], 4
          %s517 = int_to_ptr.vmem [resolvable:$true] %s516
          %522 = dma.hbm_to_vmem [thread:$0]  %s6, 512, %s517, [#allocation12], 64, 64, 4
        $region28: #{hetero_conv.1} parent=11 // pred_fallthru
          _
        // Predicated region
        $region29: #{hetero_conv.1} parent=11 // pred_check
          %p523 = pneg %p236
        $region30: #{hetero_conv.1} parent=11 // pred_check_branch
          %525 = sbr.rel (%p523) target = $region32
        $region31: #{hetero_conv.1} parent=11 // pred_region
          %s527 = ssub.s32 2048, 2048
          %528 = vsyncadd [#allocation12], %s527
          %s529 = sshll.u32 [#allocation13], 4
          %s530 = int_to_ptr.vmem [resolvable:$true] %s529
          %535 = dma.hbm_to_vmem [thread:$0]  %s7, 2048, %s530, [#allocation12], 64, 64, 4
        $region32: #{hetero_conv.1} parent=11 // pred_fallthru
          _
        // Predicated region
        $region33: #{hetero_conv.1} parent=11 // pred_check
          %p536 = pneg %p257
        $region34: #{hetero_conv.1} parent=11 // pred_check_branch
          %538 = sbr.rel (%p536) target = $region36
        $region35: #{hetero_conv.1} parent=11 // pred_region
          %s540 = ssub.s32 1024, 1024
          %541 = vsyncadd [#allocation15], %s540
          %s542 = sshll.u32 [#allocation14], 4
          %s543 = int_to_ptr.vmem [resolvable:$true] %s542
          %548 = dma.hbm_to_vmem [thread:$0]  %s8, 1024, %s543, [#allocation15], 64, 64, 4
        $region36: #{hetero_conv.1} parent=11 // pred_fallthru
          _
        // Predicated region
        $region37: #{hetero_conv.1} parent=11 // pred_check
          %p549 = pneg %p278
        $region38: #{hetero_conv.1} parent=11 // pred_check_branch
          %551 = sbr.rel (%p549) target = $region40
        $region39: #{hetero_conv.1} parent=11 // pred_region
          %s553 = ssub.s32 512, 512
          %554 = vsyncadd [#allocation15], %s553
          %s555 = sshll.u32 [#allocation16], 4
          %s556 = int_to_ptr.vmem [resolvable:$true] %s555
          %561 = dma.hbm_to_vmem [thread:$0]  %s9, 512, %s556, [#allocation15], 64, 64, 4
        $region40: #{hetero_conv.1} parent=11 // pred_fallthru
          _
        // Predicated region
        $region41: #{hetero_conv.1} parent=11 // pred_check
          %p562 = pneg %p299
        $region42: #{hetero_conv.1} parent=11 // pred_check_branch
          %564 = sbr.rel (%p562) target = $region44
        $region43: #{hetero_conv.1} parent=11 // pred_region
          %s566 = ssub.s32 512, 512
          %567 = vsyncadd [#allocation18], %s566
          %s568 = sshll.u32 [#allocation17], 4
          %s569 = int_to_ptr.vmem [resolvable:$true] %s568
          %574 = dma.hbm_to_vmem [thread:$0]  %s10, 512, %s569, [#allocation18], 64, 64, 4
        $region44: #{hetero_conv.1} parent=11 // pred_fallthru
          _
        // Predicated region
        $region45: #{hetero_conv.1} parent=11 // pred_check
          %p575 = pneg %p320
        $region46: #{hetero_conv.1} parent=11 // pred_check_branch
          %577 = sbr.rel (%p575) target = $region48
        $region47: #{hetero_conv.1} parent=11 // pred_region
          %s579 = ssub.s32 32, 32
          %580 = vsyncadd [#allocation18], %s579
          %s581 = sshll.u32 [#allocation19], 4
          %s582 = int_to_ptr.vmem [resolvable:$true] %s581
          %587 = dma.hbm_to_vmem [thread:$0]  %s11, 32, %s582, [#allocation18], 16, 16, 1
        $region48: #{hetero_conv.1} parent=11 // pred_fallthru
          _
        // Predicated region
        $region49: #{hetero_conv.1} parent=11 // pred_check
          %p588 = pneg %p341
        $region50: #{hetero_conv.1} parent=11 // pred_check_branch
          %590 = sbr.rel (%p588) target = $region52
        $region51: #{hetero_conv.1} parent=11 // pred_region
          %s592 = ssub.s32 2048, 2048
          %593 = vsyncadd [#allocation21], %s592
          %s594 = sshll.u32 [#allocation20], 4
          %s595 = int_to_ptr.vmem [resolvable:$true] %s594
          %600 = dma.hbm_to_vmem [thread:$0]  %s12, 2048, %s595, [#allocation21], 64, 64, 4
        $region52: #{hetero_conv.1} parent=11 // pred_fallthru
          _
        // Predicated region
        $region53: #{hetero_conv.1} parent=11 // pred_check
          %p601 = pneg %p362
        $region54: #{hetero_conv.1} parent=11 // pred_check_branch
          %603 = sbr.rel (%p601) target = $region56
        $region55: #{hetero_conv.1} parent=11 // pred_region
          %s605 = ssub.s32 2048, 2048
          %606 = vsyncadd [#allocation21], %s605
          %s607 = sshll.u32 [#allocation22], 4
          %s608 = int_to_ptr.vmem [resolvable:$true] %s607
          %613 = dma.hbm_to_vmem [thread:$0]  %s13, 2048, %s608, [#allocation21], 64, 64, 4
        $region56: #{hetero_conv.1} parent=11 // pred_fallthru
          _
        // Predicated region
        $region57: #{hetero_conv.1} parent=11 // pred_check
          %p614 = pneg %p383
        $region58: #{hetero_conv.1} parent=11 // pred_check_branch
          %616 = sbr.rel (%p614) target = $region60
        $region59: #{hetero_conv.1} parent=11 // pred_region
          %s618 = ssub.s32 512, 512
          %619 = vsyncadd [#allocation24], %s618
          %s620 = sshll.u32 [#allocation23], 4
          %s621 = int_to_ptr.vmem [resolvable:$true] %s620
          %626 = dma.hbm_to_vmem [thread:$0]  %s14, 512, %s621, [#allocation24], 64, 64, 4
        $region60: #{hetero_conv.1} parent=11 // pred_fallthru
          _
        // Predicated region
        $region61: #{hetero_conv.1} parent=11 // pred_check
          %p627 = pneg %p404
        $region62: #{hetero_conv.1} parent=11 // pred_check_branch
          %629 = sbr.rel (%p627) target = $region64
        $region63: #{hetero_conv.1} parent=11 // pred_region
          %s631 = ssub.s32 32, 32
          %632 = vsyncadd [#allocation24], %s631
          %s633 = sshll.u32 [#allocation25], 4
          %s634 = int_to_ptr.vmem [resolvable:$true] %s633
          %639 = dma.hbm_to_vmem [thread:$0]  %s15, 32, %s634, [#allocation24], 16, 16, 1
        $region64: #{hetero_conv.1} parent=11 // pred_fallthru
          _
      $region12: #{hetero_conv.1} parent=5 // pred_fallthru
        _
      %p640 = scmp.lt.s32.totalorder %s37, 4
      // Predicated region
      $region65: #{hetero_conv.1} parent=5 // pred_check
        %p641 = pneg %p640
      $region66: #{hetero_conv.1} parent=5 // pred_check_branch
        %643 = sbr.rel (%p641) target = $region68
      $region67: #{hetero_conv.1} parent=5 // pred_region
        // Predicated region
        $region69: #{hetero_conv.1} parent=67 // pred_check
          %p644 = pneg %p111
        $region70: #{hetero_conv.1} parent=67 // pred_check_branch
          %646 = sbr.rel (%p644) target = $region72
        $region71: #{hetero_conv.1} parent=67 // pred_region
          %s647 = sand.u32 %s37, 1
          %s648 = scalar_lea.sflag [#allocation3], %s647
          %s649 = sand.u32 %s101, 1
          %s650 = smul.addr %s649, 4
          %s651 = scalar_lea.vmem [#allocation7], %s650
          %s653 = ssub.s32 64, 64
          %654 = vsyncadd %s648, %s653
          %s655 = smul.addr %s44, 64
          %s656 = scalar_lea.hbm %s2, %s655
          %s658 = sshll.u32 %s651, 4
          %s659 = int_to_ptr.vmem [resolvable:$true] %s658
          %661 = dma.hbm_to_vmem [thread:$0]  %s656, 64, %s659, %s648
        $region72: #{hetero_conv.1} parent=67 // pred_fallthru
          _
        // Predicated region
        $region73: #{hetero_conv.1} parent=67 // pred_check
          %p662 = pneg %p139
        $region74: #{hetero_conv.1} parent=67 // pred_check_branch
          %664 = sbr.rel (%p662) target = $region76
        $region75: #{hetero_conv.1} parent=67 // pred_region
          %s665 = sand.u32 %s37, 1
          %s666 = scalar_lea.sflag [#allocation3], %s665
          %s667 = sand.u32 %s129, 1
          %s668 = smul.addr %s667, 4
          %s669 = scalar_lea.vmem [#allocation8], %s668
          %s671 = ssub.s32 64, 64
          %672 = vsyncadd %s666, %s671
          %s673 = smul.addr %s45, 2
          %s674 = sadd.s32 %s44, %s673
          %s675 = smul.addr %s674, 64
          %s676 = scalar_lea.hbm %s3, %s675
          %s678 = sshll.u32 %s669, 4
          %s679 = int_to_ptr.vmem [resolvable:$true] %s678
          %681 = dma.hbm_to_vmem [thread:$0]  %s676, 64, %s679, %s666
        $region76: #{hetero_conv.1} parent=67 // pred_fallthru
          _
        // Predicated region
        $region77: #{hetero_conv.1} parent=67 // pred_check
          %p682 = pneg %p167
        $region78: #{hetero_conv.1} parent=67 // pred_check_branch
          %684 = sbr.rel (%p682) target = $region80
        $region79: #{hetero_conv.1} parent=67 // pred_region
          %s685 = sand.u32 %s37, 1
          %s686 = scalar_lea.sflag [#allocation3], %s685
          %s687 = sand.u32 %s157, 1
          %s688 = smul.addr %s687, 4
          %s689 = scalar_lea.vmem [#allocation9], %s688
          %s691 = ssub.s32 64, 64
          %692 = vsyncadd %s686, %s691
          %s693 = smul.addr %s45, 2
          %s694 = sadd.s32 %s44, %s693
          %s695 = smul.addr %s694, 64
          %s696 = scalar_lea.hbm %s4, %s695
          %s698 = sshll.u32 %s689, 4
          %s699 = int_to_ptr.vmem [resolvable:$true] %s698
          %701 = dma.hbm_to_vmem [thread:$0]  %s696, 64, %s699, %s686
        $region80: #{hetero_conv.1} parent=67 // pred_fallthru
          _
      $region68: #{hetero_conv.1} parent=5 // pred_fallthru
        _
      %p702 = scmp.le.s32.totalorder 1, %s37
      %p703 = scmp.lt.s32.totalorder %s37, 5
      %p704 = pnand %p702, %p703
      %p705 = pneg %p704
      // Predicated region
      $region81: #{hetero_conv.1} parent=5 // pred_check
        _
      $region82: #{hetero_conv.1} parent=5 // pred_check_branch
        %707 = sbr.rel (%p704) target = $region84
      $region83: #{hetero_conv.1} parent=5 // pred_region
        %s708 = ssub.s32 %s37, 1
        // Predicated region
        $region85: #{hetero_conv.1} parent=83 // pred_check
          %p709 = pneg %p70
        $region86: #{hetero_conv.1} parent=83 // pred_check_branch
          %711 = sbr.rel (%p709) target = $region88
        $region87: #{hetero_conv.1} parent=83 // pred_region
          %712 = dma.done [#allocation3], 2048
        $region88: #{hetero_conv.1} parent=83 // pred_fallthru
          _
        // Predicated region
        $region89: #{hetero_conv.1} parent=83 // pred_check
          %p713 = pneg %p91
        $region90: #{hetero_conv.1} parent=83 // pred_check_branch
          %715 = sbr.rel (%p713) target = $region92
        $region91: #{hetero_conv.1} parent=83 // pred_region
          %716 = dma.done [#allocation6], 64
        $region92: #{hetero_conv.1} parent=83 // pred_fallthru
          _
        %s717 = sand.u32 %s42, 1
        %s718 = scalar_lea.sflag [#allocation3], %s717
        %s719 = sand.u32 %s104, 1
        %s720 = smul.addr %s719, 4
        %s721 = scalar_lea.vmem [#allocation7], %s720
        // Predicated region
        $region93: #{hetero_conv.1} parent=83 // pred_check
          %p722 = pneg %p117
        $region94: #{hetero_conv.1} parent=83 // pred_check_branch
          %724 = sbr.rel (%p722) target = $region96
        $region95: #{hetero_conv.1} parent=83 // pred_region
          %725 = dma.done %s718, 64
        $region96: #{hetero_conv.1} parent=83 // pred_fallthru
          _
        %s726 = sand.u32 %s42, 1
        %s727 = scalar_lea.sflag [#allocation3], %s726
        %s728 = sand.u32 %s132, 1
        %s729 = smul.addr %s728, 4
        %s730 = scalar_lea.vmem [#allocation8], %s729
        // Predicated region
        $region97: #{hetero_conv.1} parent=83 // pred_check
          %p731 = pneg %p145
        $region98: #{hetero_conv.1} parent=83 // pred_check_branch
          %733 = sbr.rel (%p731) target = $region100
        $region99: #{hetero_conv.1} parent=83 // pred_region
          %734 = dma.done %s727, 64
        $region100: #{hetero_conv.1} parent=83 // pred_fallthru
          _
        %s735 = sand.u32 %s42, 1
        %s736 = scalar_lea.sflag [#allocation3], %s735
        %s737 = sand.u32 %s160, 1
        %s738 = smul.addr %s737, 4
        %s739 = scalar_lea.vmem [#allocation9], %s738
        // Predicated region
        $region101: #{hetero_conv.1} parent=83 // pred_check
          %p740 = pneg %p173
        $region102: #{hetero_conv.1} parent=83 // pred_check_branch
          %742 = sbr.rel (%p740) target = $region104
        $region103: #{hetero_conv.1} parent=83 // pred_region
          %743 = dma.done %s736, 64
        $region104: #{hetero_conv.1} parent=83 // pred_fallthru
          _
        // Predicated region
        $region105: #{hetero_conv.1} parent=83 // pred_check
          %p744 = pneg %p194
        $region106: #{hetero_conv.1} parent=83 // pred_check_branch
          %746 = sbr.rel (%p744) target = $region108
        $region107: #{hetero_conv.1} parent=83 // pred_region
          %747 = dma.done [#allocation6], 512
        $region108: #{hetero_conv.1} parent=83 // pred_fallthru
          _
        // Predicated region
        $region109: #{hetero_conv.1} parent=83 // pred_check
          %p748 = pneg %p215
        $region110: #{hetero_conv.1} parent=83 // pred_check_branch
          %750 = sbr.rel (%p748) target = $region112
        $region111: #{hetero_conv.1} parent=83 // pred_region
          %751 = dma.done [#allocation12], 512
        $region112: #{hetero_conv.1} parent=83 // pred_fallthru
          _
        // Predicated region
        $region113: #{hetero_conv.1} parent=83 // pred_check
          %p752 = pneg %p236
        $region114: #{hetero_conv.1} parent=83 // pred_check_branch
          %754 = sbr.rel (%p752) target = $region116
        $region115: #{hetero_conv.1} parent=83 // pred_region
          %755 = dma.done [#allocation12], 2048
        $region116: #{hetero_conv.1} parent=83 // pred_fallthru
          _
        // Predicated region
        $region117: #{hetero_conv.1} parent=83 // pred_check
          %p756 = pneg %p257
        $region118: #{hetero_conv.1} parent=83 // pred_check_branch
          %758 = sbr.rel (%p756) target = $region120
        $region119: #{hetero_conv.1} parent=83 // pred_region
          %759 = dma.done [#allocation15], 1024
        $region120: #{hetero_conv.1} parent=83 // pred_fallthru
          _
        // Predicated region
        $region121: #{hetero_conv.1} parent=83 // pred_check
          %p760 = pneg %p278
        $region122: #{hetero_conv.1} parent=83 // pred_check_branch
          %762 = sbr.rel (%p760) target = $region124
        $region123: #{hetero_conv.1} parent=83 // pred_region
          %763 = dma.done [#allocation15], 512
        $region124: #{hetero_conv.1} parent=83 // pred_fallthru
          _
        // Predicated region
        $region125: #{hetero_conv.1} parent=83 // pred_check
          %p764 = pneg %p299
        $region126: #{hetero_conv.1} parent=83 // pred_check_branch
          %766 = sbr.rel (%p764) target = $region128
        $region127: #{hetero_conv.1} parent=83 // pred_region
          %767 = dma.done [#allocation18], 512
        $region128: #{hetero_conv.1} parent=83 // pred_fallthru
          _
        // Predicated region
        $region129: #{hetero_conv.1} parent=83 // pred_check
          %p768 = pneg %p320
        $region130: #{hetero_conv.1} parent=83 // pred_check_branch
          %770 = sbr.rel (%p768) target = $region132
        $region131: #{hetero_conv.1} parent=83 // pred_region
          %771 = dma.done [#allocation18], 32
        $region132: #{hetero_conv.1} parent=83 // pred_fallthru
          _
        // Predicated region
        $region133: #{hetero_conv.1} parent=83 // pred_check
          %p772 = pneg %p341
        $region134: #{hetero_conv.1} parent=83 // pred_check_branch
          %774 = sbr.rel (%p772) target = $region136
        $region135: #{hetero_conv.1} parent=83 // pred_region
          %775 = dma.done [#allocation21], 2048
        $region136: #{hetero_conv.1} parent=83 // pred_fallthru
          _
        // Predicated region
        $region137: #{hetero_conv.1} parent=83 // pred_check
          %p776 = pneg %p362
        $region138: #{hetero_conv.1} parent=83 // pred_check_branch
          %778 = sbr.rel (%p776) target = $region140
        $region139: #{hetero_conv.1} parent=83 // pred_region
          %779 = dma.done [#allocation21], 2048
        $region140: #{hetero_conv.1} parent=83 // pred_fallthru
          _
        // Predicated region
        $region141: #{hetero_conv.1} parent=83 // pred_check
          %p780 = pneg %p383
        $region142: #{hetero_conv.1} parent=83 // pred_check_branch
          %782 = sbr.rel (%p780) target = $region144
        $region143: #{hetero_conv.1} parent=83 // pred_region
          %783 = dma.done [#allocation24], 512
        $region144: #{hetero_conv.1} parent=83 // pred_fallthru
          _
        // Predicated region
        $region145: #{hetero_conv.1} parent=83 // pred_check
          %p784 = pneg %p404
        $region146: #{hetero_conv.1} parent=83 // pred_check_branch
          %786 = sbr.rel (%p784) target = $region148
        $region147: #{hetero_conv.1} parent=83 // pred_region
          %787 = dma.done [#allocation24], 32
        $region148: #{hetero_conv.1} parent=83 // pred_fallthru
          _
        %p788 = pneg %p70
        %p789 = pneg %p67
        %p790 = pneg %p91
        %p791 = pneg %p88
        %s792 = sand.u32 %s42, 1
        %s793 = scalar_lea.sflag [#allocation3], %s792
        %s794 = sand.u32 %s104, 1
        %s795 = smul.addr %s794, 4
        %s796 = scalar_lea.vmem [#allocation7], %s795
        %p797 = pneg %p117
        %p798 = pneg %p114
        %s799 = sand.u32 %s42, 1
        %s800 = scalar_lea.sflag [#allocation3], %s799
        %s801 = sand.u32 %s132, 1
        %s802 = smul.addr %s801, 4
        %s803 = scalar_lea.vmem [#allocation8], %s802
        %p804 = pneg %p145
        %p805 = pneg %p142
        %s806 = sand.u32 %s42, 1
        %s807 = scalar_lea.sflag [#allocation3], %s806
        %s808 = sand.u32 %s160, 1
        %s809 = smul.addr %s808, 4
        %s810 = scalar_lea.vmem [#allocation9], %s809
        %p811 = pneg %p173
        %p812 = pneg %p170
        %p813 = pneg %p194
        %p814 = pneg %p191
        %p815 = pneg %p215
        %p816 = pneg %p212
        %p817 = pneg %p236
        %p818 = pneg %p233
        %p819 = pneg %p257
        %p820 = pneg %p254
        %p821 = pneg %p278
        %p822 = pneg %p275
        %p823 = pneg %p299
        %p824 = pneg %p296
        %p825 = pneg %p320
        %p826 = pneg %p317
        %p827 = pneg %p341
        %p828 = pneg %p338
        %p829 = pneg %p362
        %p830 = pneg %p359
        %p831 = pneg %p383
        %p832 = pneg %p380
        %p833 = pneg %p404
        %p834 = pneg %p401
        %p835 = pneg %p430
        %p836 = pneg %p427
        %s837 = sand.u32 %s417, 1
        %s838 = scalar_lea.sflag [#allocation4], %s837
        %s839 = sand.u32 %s417, 1
        %s840 = smul.addr %s839, 8
        %s841 = scalar_lea.vmem [#allocation26], %s840
        %p842 = pneg %p458
        %p843 = pneg %p455
        %s844 = sand.u32 %s445, 1
        %s845 = scalar_lea.sflag [#allocation28], %s844
        %s846 = sand.u32 %s445, 1
        %s847 = smul.addr %s846, 4
        %s848 = scalar_lea.vmem [#allocation27], %s847
        %v850 = vld [vmem:[%s721] sm:$0xf]
        %v851 = vld [vmem:[%s730] sm:$0xf]
        %v852 = vld [vmem:[%s739] sm:$0xf]
        %v853 = vunpack.c.l.bf16 %v851
        %s854 = smul.u32 %s47, 4
        %s855 = smul.addr %s854, 4
        %s856 = scalar_lea.vmem [#allocation10], %s855
        %v857 = vld [vmem:[%s856] sm:$0xf]
        %v858 = vld [vmem:[%s856 + $0x4] sm:$0xf]
        %v859 = vld [vmem:[%s856 + $0x8] sm:$0xf]
        %v860 = vld [vmem:[%s856 + $0xc] sm:$0xf]
        %v865 = vunpack.c.l.b16 %v857
        %v866 = vunpack.c.l.b16 %v858
        %v867 = vunpack.c.l.b16 %v859
        %v868 = vunpack.c.l.b16 %v860
        %v869 = vpack.c.b16 %v866, %v865
        %v870 = vpack.c.b16 %v868, %v867
        %vm873 = vcmask 261120
        %v875 = vsel %vm873, %v850, 0
        %877 = vmatprep.subr.bf16.mxu0 0
        %878 = vmatpush1.bf16.msra.mxu0 %v869
        %879 = vmatprep.subr.bf16.mxu0 0
        %880 = vmatpush1.bf16.msra.mxu0 %v870
        %881 = vmatprep.subr.bf16.mxu0 0
        %882 = vmatpush1.bf16.msra.mxu0 0
        %883 = vmatprep.subr.bf16.mxu0 0
        %884 = vmatpush1.bf16.msra.mxu0 0
        %885 = vmatprep.subr.bf16.mxu0 0
        %886 = vmatpush1.bf16.msra.mxu0 0
        %887 = vmatprep.subr.bf16.mxu0 0
        %888 = vmatpush1.bf16.msra.mxu0 0
        %889 = vmatprep.subr.bf16.mxu0 0
        %890 = vmatpush1.bf16.msra.mxu0 0
        %891 = vmatprep.subr.bf16.mxu0 0
        %892 = vmatpush1.bf16.msra.mxu0 0
        %893 = vmatprep.subr.bf16.mxu0 0
        %894 = vmatpush1.bf16.msra.mxu0 0
        %895 = vmatprep.subr.bf16.mxu0 0
        %896 = vmatpush1.bf16.msra.mxu0 0
        %897 = vmatprep.subr.bf16.mxu0 0
        %898 = vmatpush1.bf16.msra.mxu0 0
        %899 = vmatprep.subr.bf16.mxu0 0
        %900 = vmatpush1.bf16.msra.mxu0 0
        %901 = vmatprep.subr.bf16.mxu0 0
        %902 = vmatpush1.bf16.msra.mxu0 0
        %903 = vmatprep.subr.bf16.mxu0 0
        %904 = vmatpush1.bf16.msra.mxu0 0
        %905 = vmatprep.subr.bf16.mxu0 0
        %906 = vmatpush1.bf16.msra.mxu0 0
        %907 = vmatprep.subr.bf16.mxu0 0
        %908 = vmatpush1.bf16.msra.mxu0 0
        %909 = vmatprep.mubr.bf16.mxu0 0
        %910 = vmatmul.mubr.bf16.gmra.mrb[0].mxu0 %v875
        %v911 = vpop.f32.mrb[0].mxu0
        %v912 = vadd.f32 0.0, %v911
        %v913 = vpop.f32.mrb[0].mxu0
        %v914 = vpop.f32.mrb[0].mxu0
        %v915 = vpop.f32.mrb[0].mxu0
        %916 = vdwg.mxu0
        %v917 = vmul.f32 %v853, %v912
        %v918 = vld [vmem:[#allocation2] sm:$0xff]
        %v919 = vld [vmem:[#allocation2 + $0x8] sm:$0xff]
        %v920 = vld [vmem:[#allocation2 + $0x10] sm:$0xff]
        %v921 = vld [vmem:[#allocation2 + $0x18] sm:$0xff]
        %v922 = vld [vmem:[#allocation2 + $0x20] sm:$0xff]
        %v923 = vld [vmem:[#allocation2 + $0x28] sm:$0xff]
        %v924 = vld [vmem:[#allocation2 + $0x30] sm:$0xff]
        %v925 = vld [vmem:[#allocation2 + $0x38] sm:$0xff]
        %v926 = vld [vmem:[#allocation2 + $0x40] sm:$0xff]
        %v927 = vld [vmem:[#allocation2 + $0x48] sm:$0xff]
        %v928 = vld [vmem:[#allocation2 + $0x50] sm:$0xff]
        %v929 = vld [vmem:[#allocation2 + $0x58] sm:$0xff]
        %v930 = vld [vmem:[#allocation2 + $0x60] sm:$0xff]
        %v931 = vld [vmem:[#allocation2 + $0x68] sm:$0xff]
        %v932 = vld [vmem:[#allocation2 + $0x70] sm:$0xff]
        %v933 = vld [vmem:[#allocation2 + $0x78] sm:$0xff]
        %934 = vmatprep.subr.mxu0 0.0
        %935 = vmatpush1.msra.mxu0 %v918
        %936 = vmatprep.subr.mxu0 0.0
        %937 = vmatpush1.msra.mxu0 %v919
        %938 = vmatprep.subr.mxu0 0.0
        %939 = vmatpush1.msra.mxu0 %v920
        %940 = vmatprep.subr.mxu0 0.0
        %941 = vmatpush1.msra.mxu0 %v921
        %942 = vmatprep.subr.mxu0 0.0
        %943 = vmatpush1.msra.mxu0 %v922
        %944 = vmatprep.subr.mxu0 0.0
        %945 = vmatpush1.msra.mxu0 %v923
        %946 = vmatprep.subr.mxu0 0.0
        %947 = vmatpush1.msra.mxu0 %v924
        %948 = vmatprep.subr.mxu0 0.0
        %949 = vmatpush1.msra.mxu0 %v925
        %950 = vmatprep.subr.mxu0 0.0
        %951 = vmatpush1.msra.mxu0 %v926
        %952 = vmatprep.subr.mxu0 0.0
        %953 = vmatpush1.msra.mxu0 %v927
        %954 = vmatprep.subr.mxu0 0.0
        %955 = vmatpush1.msra.mxu0 %v928
        %956 = vmatprep.subr.mxu0 0.0
        %957 = vmatpush1.msra.mxu0 %v929
        %958 = vmatprep.subr.mxu0 0.0
        %959 = vmatpush1.msra.mxu0 %v930
        %960 = vmatprep.subr.mxu0 0.0
        %961 = vmatpush1.msra.mxu0 %v931
        %962 = vmatprep.subr.mxu0 0.0
        %963 = vmatpush1.msra.mxu0 %v932
        %964 = vmatprep.subr.mxu0 0.0
        %965 = vmatpush1.msra.mxu0 %v933
        %966 = vmatprep.subr.mxu0 0.0
        %967 = vmatpush1.msra.mxu0 0.0
        %968 = vmatprep.subr.mxu0 0.0
        %969 = vmatpush1.msra.mxu0 0.0
        %970 = vmatprep.subr.mxu0 0.0
        %971 = vmatpush1.msra.mxu0 0.0
        %972 = vmatprep.subr.mxu0 0.0
        %973 = vmatpush1.msra.mxu0 0.0
        %974 = vmatprep.subr.mxu0 0.0
        %975 = vmatpush1.msra.mxu0 0.0
        %976 = vmatprep.subr.mxu0 0.0
        %977 = vmatpush1.msra.mxu0 0.0
        %978 = vmatprep.subr.mxu0 0.0
        %979 = vmatpush1.msra.mxu0 0.0
        %980 = vmatprep.subr.mxu0 0.0
        %981 = vmatpush1.msra.mxu0 0.0
        %982 = vmatprep.subr.mxu0 0.0
        %983 = vmatpush1.msra.mxu0 0.0
        %984 = vmatprep.subr.mxu0 0.0
        %985 = vmatpush1.msra.mxu0 0.0
        %986 = vmatprep.subr.mxu0 0.0
        %987 = vmatpush1.msra.mxu0 0.0
        %988 = vmatprep.subr.mxu0 0.0
        %989 = vmatpush1.msra.mxu0 0.0
        %990 = vmatprep.subr.mxu0 0.0
        %991 = vmatpush1.msra.mxu0 0.0
        %992 = vmatprep.subr.mxu0 0.0
        %993 = vmatpush1.msra.mxu0 0.0
        %994 = vmatprep.subr.mxu0 0.0
        %995 = vmatpush1.msra.mxu0 0.0
        %996 = vmatprep.subr.mxu0 0.0
        %997 = vmatpush1.msra.mxu0 0.0
        %998 = vmatprep.mubr.f32.mxu0 0.0
        %999 = vmatmul.mubr.f32.gmra.mrb[0].mxu0 %v917
        %v1000 = vpop.f32.mrb[0].mxu0
        %v1001 = vadd.f32 0.0, %v1000
        %v1002 = vpop.f32.mrb[0].mxu0
        %1003 = vdwg.mxu0
        %vm1004 = vcmask 31744
        %v1005 = vsel %vm1004, %v1001, -inf
        %1006 = vmax.xlane.f32.xlu0 %v1005
        %v1007 = vpop.xlane.xlu0 %1006
        %v1008 = vsub.f32 %v1001, %v1007
        %v1009 = vmul.f32 %v1008, 1.442695
        %v1010 = vpow.pop %v1009
        %v1011 = vsel %vm1004, %v1010, 0.0
        %1012 = vadd.xlane.f32.xlu0 %v1011
        %v1013 = vpop.xlane.xlu0 %1012
        %v1014 = vrcp.pop %v1013
        %v1015 = vmul.f32 %v1010, %v1014
        %v1016 = vld [vmem:[#allocation5] sm:$0xf]
        %v1018 = vsel %vm1004, %v1015, 0
        %vm1020 = vcmask 1043456
        %v1022 = vsel %vm1020, %v1016, 0
        %1024 = vmatprep.subr.mxu0 0.0
        %1025 = vmatpush1.msra.mxu0 %v1022
        %1026 = vmatprep.subr.mxu0 0.0
        %1027 = vmatpush1.msra.mxu0 0.0
        %1028 = vmatprep.subr.mxu0 0.0
        %1029 = vmatpush1.msra.mxu0 0.0
        %1030 = vmatprep.subr.mxu0 0.0
        %1031 = vmatpush1.msra.mxu0 0.0
        %1032 = vmatprep.subr.mxu0 0.0
        %1033 = vmatpush1.msra.mxu0 0.0
        %1034 = vmatprep.subr.mxu0 0.0
        %1035 = vmatpush1.msra.mxu0 0.0
        %1036 = vmatprep.subr.mxu0 0.0
        %1037 = vmatpush1.msra.mxu0 0.0
        %1038 = vmatprep.subr.mxu0 0.0
        %1039 = vmatpush1.msra.mxu0 0.0
        %1040 = vmatprep.subr.mxu0 0.0
        %1041 = vmatpush1.msra.mxu0 0.0
        %1042 = vmatprep.subr.mxu0 0.0
        %1043 = vmatpush1.msra.mxu0 0.0
        %1044 = vmatprep.subr.mxu0 0.0
        %1045 = vmatpush1.msra.mxu0 0.0
        %1046 = vmatprep.subr.mxu0 0.0
        %1047 = vmatpush1.msra.mxu0 0.0
        %1048 = vmatprep.subr.mxu0 0.0
        %1049 = vmatpush1.msra.mxu0 0.0
        %1050 = vmatprep.subr.mxu0 0.0
        %1051 = vmatpush1.msra.mxu0 0.0
        %1052 = vmatprep.subr.mxu0 0.0
        %1053 = vmatpush1.msra.mxu0 0.0
        %1054 = vmatprep.subr.mxu0 0.0
        %1055 = vmatpush1.msra.mxu0 0.0
        %1056 = vmatprep.subr.mxu0 0.0
        %1057 = vmatpush1.msra.mxu0 0.0
        %1058 = vmatprep.subr.mxu0 0.0
        %1059 = vmatpush1.msra.mxu0 0.0
        %1060 = vmatprep.subr.mxu0 0.0
        %1061 = vmatpush1.msra.mxu0 0.0
        %1062 = vmatprep.subr.mxu0 0.0
        %1063 = vmatpush1.msra.mxu0 0.0
        %1064 = vmatprep.subr.mxu0 0.0
        %1065 = vmatpush1.msra.mxu0 0.0
        %1066 = vmatprep.subr.mxu0 0.0
        %1067 = vmatpush1.msra.mxu0 0.0
        %1068 = vmatprep.subr.mxu0 0.0
        %1069 = vmatpush1.msra.mxu0 0.0
        %1070 = vmatprep.subr.mxu0 0.0
        %1071 = vmatpush1.msra.mxu0 0.0
        %1072 = vmatprep.subr.mxu0 0.0
        %1073 = vmatpush1.msra.mxu0 0.0
        %1074 = vmatprep.subr.mxu0 0.0
        %1075 = vmatpush1.msra.mxu0 0.0
        %1076 = vmatprep.subr.mxu0 0.0
        %1077 = vmatpush1.msra.mxu0 0.0
        %1078 = vmatprep.subr.mxu0 0.0
        %1079 = vmatpush1.msra.mxu0 0.0
        %1080 = vmatprep.subr.mxu0 0.0
        %1081 = vmatpush1.msra.mxu0 0.0
        %1082 = vmatprep.subr.mxu0 0.0
        %1083 = vmatpush1.msra.mxu0 0.0
        %1084 = vmatprep.subr.mxu0 0.0
        %1085 = vmatpush1.msra.mxu0 0.0
        %1086 = vmatprep.subr.mxu0 0.0
        %1087 = vmatpush1.msra.mxu0 0.0
        %1088 = vmatprep.mubr.f32.mxu0 0.0
        %1089 = vmatmul.mubr.f32.gmra.mrb[0].mxu0 %v1018
        %v1090 = vpop.f32.mrb[0].mxu0
        %v1091 = vadd.f32 0.0, %v1090
        %v1092 = vpop.f32.mrb[0].mxu0
        %1093 = vdwg.mxu0
        %v1094 = vmul.f32 %v1091, %v853
        %v1095 = vpack.c.bf16 %v1094, %v1094
        %s1096 = smul.addr %s854, 4
        %s1097 = scalar_lea.vmem [#allocation11], %s1096
        %v1098 = vld [vmem:[%s1097] sm:$0xf]
        %v1099 = vld [vmem:[%s1097 + $0x4] sm:$0xf]
        %v1100 = vld [vmem:[%s1097 + $0x8] sm:$0xf]
        %v1101 = vld [vmem:[%s1097 + $0xc] sm:$0xf]
        %s1102 = smul.u32 %s47, 16
        %s1103 = smul.addr %s1102, 4
        %s1104 = scalar_lea.vmem [#allocation13], %s1103
        %v1105 = vld [vmem:[%s1104] sm:$0xf]
        %v1106 = vld [vmem:[%s1104 + $0x4] sm:$0xf]
        %v1107 = vld [vmem:[%s1104 + $0x8] sm:$0xf]
        %v1108 = vld [vmem:[%s1104 + $0xc] sm:$0xf]
        %v1109 = vld [vmem:[%s1104 + $0x10] sm:$0xf]
        %v1110 = vld [vmem:[%s1104 + $0x14] sm:$0xf]
        %v1111 = vld [vmem:[%s1104 + $0x18] sm:$0xf]
        %v1112 = vld [vmem:[%s1104 + $0x1c] sm:$0xf]
        %v1113 = vld [vmem:[%s1104 + $0x20] sm:$0xf]
        %v1114 = vld [vmem:[%s1104 + $0x24] sm:$0xf]
        %v1115 = vld [vmem:[%s1104 + $0x28] sm:$0xf]
        %v1116 = vld [vmem:[%s1104 + $0x2c] sm:$0xf]
        %v1117 = vld [vmem:[%s1104 + $0x30] sm:$0xf]
        %v1118 = vld [vmem:[%s1104 + $0x34] sm:$0xf]
        %v1119 = vld [vmem:[%s1104 + $0x38] sm:$0xf]
        %v1120 = vld [vmem:[%s1104 + $0x3c] sm:$0xf]
        %v1137 = vunpack.c.l.b16 %v1105
        %v1138 = vunpack.c.l.b16 %v1106
        %v1139 = vunpack.c.l.b16 %v1107
        %v1140 = vunpack.c.l.b16 %v1108
        %v1141 = vunpack.c.l.b16 %v1109
        %v1142 = vunpack.c.l.b16 %v1110
        %v1143 = vunpack.c.l.b16 %v1111
        %v1144 = vunpack.c.l.b16 %v1112
        %v1145 = vunpack.c.l.b16 %v1113
        %v1146 = vunpack.c.l.b16 %v1114
        %v1147 = vunpack.c.l.b16 %v1115
        %v1148 = vunpack.c.l.b16 %v1116
        %v1149 = vunpack.c.l.b16 %v1117
        %v1150 = vunpack.c.l.b16 %v1118
        %v1151 = vunpack.c.l.b16 %v1119
        %v1152 = vunpack.c.l.b16 %v1120
        %v1153 = vpack.c.b16 %v1138, %v1137
        %v1154 = vpack.c.b16 %v1140, %v1139
        %v1155 = vpack.c.b16 %v1142, %v1141
        %v1156 = vpack.c.b16 %v1144, %v1143
        %v1157 = vpack.c.b16 %v1146, %v1145
        %v1158 = vpack.c.b16 %v1148, %v1147
        %v1159 = vpack.c.b16 %v1150, %v1149
        %v1160 = vpack.c.b16 %v1152, %v1151
        %1169 = vmatprep.subr.bf16.mxu0 0
        %1170 = vmatpush1.bf16.msra.mxu0 %v1153
        %1171 = vmatprep.subr.bf16.mxu0 0
        %1172 = vmatpush1.bf16.msra.mxu0 %v1154
        %1173 = vmatprep.subr.bf16.mxu0 0
        %1174 = vmatpush1.bf16.msra.mxu0 %v1155
        %1175 = vmatprep.subr.bf16.mxu0 0
        %1176 = vmatpush1.bf16.msra.mxu0 %v1156
        %1177 = vmatprep.subr.bf16.mxu0 0
        %1178 = vmatpush1.bf16.msra.mxu0 %v1157
        %1179 = vmatprep.subr.bf16.mxu0 0
        %1180 = vmatpush1.bf16.msra.mxu0 %v1158
        %1181 = vmatprep.subr.bf16.mxu0 0
        %1182 = vmatpush1.bf16.msra.mxu0 %v1159
        %1183 = vmatprep.subr.bf16.mxu0 0
        %1184 = vmatpush1.bf16.msra.mxu0 %v1160
        %1185 = vmatprep.subr.bf16.mxu0 0
        %1186 = vmatpush1.bf16.msra.mxu0 0
        %1187 = vmatprep.subr.bf16.mxu0 0
        %1188 = vmatpush1.bf16.msra.mxu0 0
        %1189 = vmatprep.subr.bf16.mxu0 0
        %1190 = vmatpush1.bf16.msra.mxu0 0
        %1191 = vmatprep.subr.bf16.mxu0 0
        %1192 = vmatpush1.bf16.msra.mxu0 0
        %1193 = vmatprep.subr.bf16.mxu0 0
        %1194 = vmatpush1.bf16.msra.mxu0 0
        %1195 = vmatprep.subr.bf16.mxu0 0
        %1196 = vmatpush1.bf16.msra.mxu0 0
        %1197 = vmatprep.subr.bf16.mxu0 0
        %1198 = vmatpush1.bf16.msra.mxu0 0
        %1199 = vmatprep.subr.bf16.mxu0 0
        %1200 = vmatpush1.bf16.msra.mxu0 0
        %1201 = vmatprep.mubr.bf16.mxu0 0
        %1202 = vmatmul.mubr.bf16.gmra.mrb[0].mxu0 %v1095
        %v1203 = vpop.f32.mrb[0].mxu0
        %v1204 = vadd.f32 0.0, %v1203
        %v1205 = vpop.f32.mrb[0].mxu0
        %v1206 = vpop.f32.mrb[0].mxu0
        %v1207 = vpop.f32.mrb[0].mxu0
        %1208 = vdwg.mxu0
        %v1213 = vunpack.c.l.b16 %v1098
        %v1214 = vunpack.c.l.b16 %v1099
        %v1215 = vunpack.c.l.b16 %v1100
        %v1216 = vunpack.c.l.b16 %v1101
        %v1217 = vpack.c.b16 %v1214, %v1213
        %v1218 = vpack.c.b16 %v1216, %v1215
        %1221 = vmatprep.subr.bf16.mxu0 0
        %1222 = vmatpush1.bf16.msra.mxu0 %v1217
        %1223 = vmatprep.subr.bf16.mxu0 0
        %1224 = vmatpush1.bf16.msra.mxu0 %v1218
        %1225 = vmatprep.subr.bf16.mxu0 0
        %1226 = vmatpush1.bf16.msra.mxu0 0
        %1227 = vmatprep.subr.bf16.mxu0 0
        %1228 = vmatpush1.bf16.msra.mxu0 0
        %1229 = vmatprep.subr.bf16.mxu0 0
        %1230 = vmatpush1.bf16.msra.mxu0 0
        %1231 = vmatprep.subr.bf16.mxu0 0
        %1232 = vmatpush1.bf16.msra.mxu0 0
        %1233 = vmatprep.subr.bf16.mxu0 0
        %1234 = vmatpush1.bf16.msra.mxu0 0
        %1235 = vmatprep.subr.bf16.mxu0 0
        %1236 = vmatpush1.bf16.msra.mxu0 0
        %1237 = vmatprep.subr.bf16.mxu0 0
        %1238 = vmatpush1.bf16.msra.mxu0 0
        %1239 = vmatprep.subr.bf16.mxu0 0
        %1240 = vmatpush1.bf16.msra.mxu0 0
        %1241 = vmatprep.subr.bf16.mxu0 0
        %1242 = vmatpush1.bf16.msra.mxu0 0
        %1243 = vmatprep.subr.bf16.mxu0 0
        %1244 = vmatpush1.bf16.msra.mxu0 0
        %1245 = vmatprep.subr.bf16.mxu0 0
        %1246 = vmatpush1.bf16.msra.mxu0 0
        %1247 = vmatprep.subr.bf16.mxu0 0
        %1248 = vmatpush1.bf16.msra.mxu0 0
        %1249 = vmatprep.subr.bf16.mxu0 0
        %1250 = vmatpush1.bf16.msra.mxu0 0
        %1251 = vmatprep.subr.bf16.mxu0 0
        %1252 = vmatpush1.bf16.msra.mxu0 0
        %1253 = vmatprep.mubr.bf16.mxu0 0
        %1254 = vmatmul.mubr.bf16.gmra.mrb[0].mxu0 %v875
        %v1255 = vpop.f32.mrb[0].mxu0
        %v1256 = vadd.f32 %v1204, %v1255
        %v1257 = vpop.f32.mrb[0].mxu0
        %v1258 = vpop.f32.mrb[0].mxu0
        %v1259 = vpop.f32.mrb[0].mxu0
        %1260 = vdwg.mxu0
        %v1261 = vtanh.pop %v1256
        %v1262 = vpack.c.bf16 %v1261, %v1261
        %s1263 = smul.u32 %s47, 8
        %s1264 = smul.addr %s1263, 4
        %s1265 = scalar_lea.vmem [#allocation14], %s1264
        %v1266 = vld [vmem:[%s1265] sm:$0xf]
        %v1267 = vld [vmem:[%s1265 + $0x4] sm:$0xf]
        %v1268 = vld [vmem:[%s1265 + $0x8] sm:$0xf]
        %v1269 = vld [vmem:[%s1265 + $0xc] sm:$0xf]
        %v1270 = vld [vmem:[%s1265 + $0x10] sm:$0xf]
        %v1271 = vld [vmem:[%s1265 + $0x14] sm:$0xf]
        %v1272 = vld [vmem:[%s1265 + $0x18] sm:$0xf]
        %v1273 = vld [vmem:[%s1265 + $0x1c] sm:$0xf]
        %v1282 = vunpack.c.l.b16 %v1266
        %v1283 = vunpack.c.l.b16 %v1267
        %v1284 = vunpack.c.l.b16 %v1268
        %v1285 = vunpack.c.l.b16 %v1269
        %v1286 = vunpack.c.l.b16 %v1270
        %v1287 = vunpack.c.l.b16 %v1271
        %v1288 = vunpack.c.l.b16 %v1272
        %v1289 = vunpack.c.l.b16 %v1273
        %v1290 = vpack.c.b16 %v1283, %v1282
        %v1291 = vpack.c.b16 %v1285, %v1284
        %v1292 = vpack.c.b16 %v1287, %v1286
        %v1293 = vpack.c.b16 %v1289, %v1288
        %vm1298 = vcmask 523264
        %v1300 = vsel %vm1298, %v1262, 0
        %1302 = vmatprep.subr.bf16.mxu0 0
        %1303 = vmatpush1.bf16.msra.mxu0 %v1290
        %1304 = vmatprep.subr.bf16.mxu0 0
        %1305 = vmatpush1.bf16.msra.mxu0 %v1291
        %1306 = vmatprep.subr.bf16.mxu0 0
        %1307 = vmatpush1.bf16.msra.mxu0 %v1292
        %1308 = vmatprep.subr.bf16.mxu0 0
        %1309 = vmatpush1.bf16.msra.mxu0 %v1293
        %1310 = vmatprep.subr.bf16.mxu0 0
        %1311 = vmatpush1.bf16.msra.mxu0 0
        %1312 = vmatprep.subr.bf16.mxu0 0
        %1313 = vmatpush1.bf16.msra.mxu0 0
        %1314 = vmatprep.subr.bf16.mxu0 0
        %1315 = vmatpush1.bf16.msra.mxu0 0
        %1316 = vmatprep.subr.bf16.mxu0 0
        %1317 = vmatpush1.bf16.msra.mxu0 0
        %1318 = vmatprep.subr.bf16.mxu0 0
        %1319 = vmatpush1.bf16.msra.mxu0 0
        %1320 = vmatprep.subr.bf16.mxu0 0
        %1321 = vmatpush1.bf16.msra.mxu0 0
        %1322 = vmatprep.subr.bf16.mxu0 0
        %1323 = vmatpush1.bf16.msra.mxu0 0
        %1324 = vmatprep.subr.bf16.mxu0 0
        %1325 = vmatpush1.bf16.msra.mxu0 0
        %1326 = vmatprep.subr.bf16.mxu0 0
        %1327 = vmatpush1.bf16.msra.mxu0 0
        %1328 = vmatprep.subr.bf16.mxu0 0
        %1329 = vmatpush1.bf16.msra.mxu0 0
        %1330 = vmatprep.subr.bf16.mxu0 0
        %1331 = vmatpush1.bf16.msra.mxu0 0
        %1332 = vmatprep.subr.bf16.mxu0 0
        %1333 = vmatpush1.bf16.msra.mxu0 0
        %1334 = vmatprep.mubr.bf16.mxu0 0
        %1335 = vmatmul.mubr.bf16.gmra.mrb[0].mxu0 %v1300
        %v1336 = vpop.f32.mrb[0].mxu0
        %v1337 = vadd.f32 0.0, %v1336
        %v1338 = vpop.f32.mrb[0].mxu0
        %v1339 = vpop.f32.mrb[0].mxu0
        %v1340 = vpop.f32.mrb[0].mxu0
        %1341 = vdwg.mxu0
        %v1342 = vmax.f32 %v1337, 0.0
        %s1343 = smul.addr %s854, 4
        %s1344 = scalar_lea.vmem [#allocation16], %s1343
        %v1345 = vld [vmem:[%s1344] sm:$0xf]
        %v1346 = vld [vmem:[%s1344 + $0x4] sm:$0xf]
        %v1347 = vld [vmem:[%s1344 + $0x8] sm:$0xf]
        %v1348 = vld [vmem:[%s1344 + $0xc] sm:$0xf]
        %v1349 = vpack.c.bf16 %v1342, %v1342
        %s1350 = smul.addr %s854, 4
        %s1351 = scalar_lea.vmem [#allocation17], %s1350
        %v1352 = vld [vmem:[%s1351] sm:$0xf]
        %v1353 = vld [vmem:[%s1351 + $0x4] sm:$0xf]
        %v1354 = vld [vmem:[%s1351 + $0x8] sm:$0xf]
        %v1355 = vld [vmem:[%s1351 + $0xc] sm:$0xf]
        %v1360 = vunpack.c.l.b16 %v1352
        %v1361 = vunpack.c.l.b16 %v1353
        %v1362 = vunpack.c.l.b16 %v1354
        %v1363 = vunpack.c.l.b16 %v1355
        %v1364 = vpack.c.b16 %v1361, %v1360
        %v1365 = vpack.c.b16 %v1363, %v1362
        %v1369 = vsel %vm873, %v1349, 0
        %1371 = vmatprep.subr.bf16.mxu0 0
        %1372 = vmatpush1.bf16.msra.mxu0 %v1364
        %1373 = vmatprep.subr.bf16.mxu0 0
        %1374 = vmatpush1.bf16.msra.mxu0 %v1365
        %1375 = vmatprep.subr.bf16.mxu0 0
        %1376 = vmatpush1.bf16.msra.mxu0 0
        %1377 = vmatprep.subr.bf16.mxu0 0
        %1378 = vmatpush1.bf16.msra.mxu0 0
        %1379 = vmatprep.subr.bf16.mxu0 0
        %1380 = vmatpush1.bf16.msra.mxu0 0
        %1381 = vmatprep.subr.bf16.mxu0 0
        %1382 = vmatpush1.bf16.msra.mxu0 0
        %1383 = vmatprep.subr.bf16.mxu0 0
        %1384 = vmatpush1.bf16.msra.mxu0 0
        %1385 = vmatprep.subr.bf16.mxu0 0
        %1386 = vmatpush1.bf16.msra.mxu0 0
        %1387 = vmatprep.subr.bf16.mxu0 0
        %1388 = vmatpush1.bf16.msra.mxu0 0
        %1389 = vmatprep.subr.bf16.mxu0 0
        %1390 = vmatpush1.bf16.msra.mxu0 0
        %1391 = vmatprep.subr.bf16.mxu0 0
        %1392 = vmatpush1.bf16.msra.mxu0 0
        %1393 = vmatprep.subr.bf16.mxu0 0
        %1394 = vmatpush1.bf16.msra.mxu0 0
        %1395 = vmatprep.subr.bf16.mxu0 0
        %1396 = vmatpush1.bf16.msra.mxu0 0
        %1397 = vmatprep.subr.bf16.mxu0 0
        %1398 = vmatpush1.bf16.msra.mxu0 0
        %1399 = vmatprep.subr.bf16.mxu0 0
        %1400 = vmatpush1.bf16.msra.mxu0 0
        %1401 = vmatprep.subr.bf16.mxu0 0
        %1402 = vmatpush1.bf16.msra.mxu0 0
        %1403 = vmatprep.mubr.bf16.mxu0 0
        %1404 = vmatmul.mubr.bf16.gmra.mrb[0].mxu0 %v1369
        %v1405 = vpop.f32.mrb[0].mxu0
        %v1406 = vadd.f32 0.0, %v1405
        %v1407 = vpop.f32.mrb[0].mxu0
        %v1408 = vpop.f32.mrb[0].mxu0
        %v1409 = vpop.f32.mrb[0].mxu0
        %1410 = vdwg.mxu0
        %v1415 = vunpack.c.l.b16 %v1345
        %v1416 = vunpack.c.l.b16 %v1346
        %v1417 = vunpack.c.l.b16 %v1347
        %v1418 = vunpack.c.l.b16 %v1348
        %v1419 = vpack.c.b16 %v1416, %v1415
        %v1420 = vpack.c.b16 %v1418, %v1417
        %1423 = vmatprep.subr.bf16.mxu0 0
        %1424 = vmatpush1.bf16.msra.mxu0 %v1419
        %1425 = vmatprep.subr.bf16.mxu0 0
        %1426 = vmatpush1.bf16.msra.mxu0 %v1420
        %1427 = vmatprep.subr.bf16.mxu0 0
        %1428 = vmatpush1.bf16.msra.mxu0 0
        %1429 = vmatprep.subr.bf16.mxu0 0
        %1430 = vmatpush1.bf16.msra.mxu0 0
        %1431 = vmatprep.subr.bf16.mxu0 0
        %1432 = vmatpush1.bf16.msra.mxu0 0
        %1433 = vmatprep.subr.bf16.mxu0 0
        %1434 = vmatpush1.bf16.msra.mxu0 0
        %1435 = vmatprep.subr.bf16.mxu0 0
        %1436 = vmatpush1.bf16.msra.mxu0 0
        %1437 = vmatprep.subr.bf16.mxu0 0
        %1438 = vmatpush1.bf16.msra.mxu0 0
        %1439 = vmatprep.subr.bf16.mxu0 0
        %1440 = vmatpush1.bf16.msra.mxu0 0
        %1441 = vmatprep.subr.bf16.mxu0 0
        %1442 = vmatpush1.bf16.msra.mxu0 0
        %1443 = vmatprep.subr.bf16.mxu0 0
        %1444 = vmatpush1.bf16.msra.mxu0 0
        %1445 = vmatprep.subr.bf16.mxu0 0
        %1446 = vmatpush1.bf16.msra.mxu0 0
        %1447 = vmatprep.subr.bf16.mxu0 0
        %1448 = vmatpush1.bf16.msra.mxu0 0
        %1449 = vmatprep.subr.bf16.mxu0 0
        %1450 = vmatpush1.bf16.msra.mxu0 0
        %1451 = vmatprep.subr.bf16.mxu0 0
        %1452 = vmatpush1.bf16.msra.mxu0 0
        %1453 = vmatprep.subr.bf16.mxu0 0
        %1454 = vmatpush1.bf16.msra.mxu0 0
        %1455 = vmatprep.mubr.bf16.mxu0 0
        %1456 = vmatmul.mubr.bf16.gmra.mrb[0].mxu0 %v875
        %v1457 = vpop.f32.mrb[0].mxu0
        %v1458 = vadd.f32 %v1406, %v1457
        %v1459 = vpop.f32.mrb[0].mxu0
        %v1460 = vpop.f32.mrb[0].mxu0
        %v1461 = vpop.f32.mrb[0].mxu0
        %1462 = vdwg.mxu0
        %s1463 = scalar_lea.vmem [#allocation19], %s47
        %v1464 = vld [vmem:[%s1463] sm:$0x1]
        %v1465 = vunpack.c.l.bf16 %v1464
        %v1466 = vlaneseq
        %v1467 = vshrl.u32 %v1466, 7
        %v1468 = vsub.s32 0, %v1467
        %v1469 = vrot.slane %v1465, %v1468
        %v1470 = vadd.f32 %v1458, %v1469
        %p1471 = scmp.eq.s32.totalorder %s47, 0
        // Predicated region
        $region149: #{hetero_conv.1} parent=83 // pred_check
          %p1472 = pneg %p1471
        $region150: #{hetero_conv.1} parent=83 // pred_check_branch
          %1474 = sbr.rel (%p1472) target = $region152
        $region151: #{hetero_conv.1} parent=83 // pred_region
          %1475 = vst.msk [vmem:[%s841] sm:$0xff] %vm873, 0.0
        $region152: #{hetero_conv.1} parent=83 // pred_fallthru
          _
        %v1476 = vld [vmem:[%s841] sm:$0xff]
        %v1477 = vadd.f32 %v1476, %v1470
        %1478 = vst.msk [vmem:[%s841] sm:$0xff] %vm873, %v1477
        %s1479 = smul.addr %s1102, 4
        %s1480 = scalar_lea.vmem [#allocation20], %s1479
        %v1481 = vld [vmem:[%s1480] sm:$0xf]
        %v1482 = vld [vmem:[%s1480 + $0x4] sm:$0xf]
        %v1483 = vld [vmem:[%s1480 + $0x8] sm:$0xf]
        %v1484 = vld [vmem:[%s1480 + $0xc] sm:$0xf]
        %v1485 = vld [vmem:[%s1480 + $0x10] sm:$0xf]
        %v1486 = vld [vmem:[%s1480 + $0x14] sm:$0xf]
        %v1487 = vld [vmem:[%s1480 + $0x18] sm:$0xf]
        %v1488 = vld [vmem:[%s1480 + $0x1c] sm:$0xf]
        %v1489 = vld [vmem:[%s1480 + $0x20] sm:$0xf]
        %v1490 = vld [vmem:[%s1480 + $0x24] sm:$0xf]
        %v1491 = vld [vmem:[%s1480 + $0x28] sm:$0xf]
        %v1492 = vld [vmem:[%s1480 + $0x2c] sm:$0xf]
        %v1493 = vld [vmem:[%s1480 + $0x30] sm:$0xf]
        %v1494 = vld [vmem:[%s1480 + $0x34] sm:$0xf]
        %v1495 = vld [vmem:[%s1480 + $0x38] sm:$0xf]
        %v1496 = vld [vmem:[%s1480 + $0x3c] sm:$0xf]
        %s1497 = smul.addr %s1102, 4
        %s1498 = scalar_lea.vmem [#allocation22], %s1497
        %v1499 = vld [vmem:[%s1498] sm:$0xf]
        %v1500 = vld [vmem:[%s1498 + $0x4] sm:$0xf]
        %v1501 = vld [vmem:[%s1498 + $0x8] sm:$0xf]
        %v1502 = vld [vmem:[%s1498 + $0xc] sm:$0xf]
        %v1503 = vld [vmem:[%s1498 + $0x10] sm:$0xf]
        %v1504 = vld [vmem:[%s1498 + $0x14] sm:$0xf]
        %v1505 = vld [vmem:[%s1498 + $0x18] sm:$0xf]
        %v1506 = vld [vmem:[%s1498 + $0x1c] sm:$0xf]
        %v1507 = vld [vmem:[%s1498 + $0x20] sm:$0xf]
        %v1508 = vld [vmem:[%s1498 + $0x24] sm:$0xf]
        %v1509 = vld [vmem:[%s1498 + $0x28] sm:$0xf]
        %v1510 = vld [vmem:[%s1498 + $0x2c] sm:$0xf]
        %v1511 = vld [vmem:[%s1498 + $0x30] sm:$0xf]
        %v1512 = vld [vmem:[%s1498 + $0x34] sm:$0xf]
        %v1513 = vld [vmem:[%s1498 + $0x38] sm:$0xf]
        %v1514 = vld [vmem:[%s1498 + $0x3c] sm:$0xf]
        %v1531 = vunpack.c.l.b16 %v1499
        %v1532 = vunpack.c.l.b16 %v1500
        %v1533 = vunpack.c.l.b16 %v1501
        %v1534 = vunpack.c.l.b16 %v1502
        %v1535 = vunpack.c.l.b16 %v1503
        %v1536 = vunpack.c.l.b16 %v1504
        %v1537 = vunpack.c.l.b16 %v1505
        %v1538 = vunpack.c.l.b16 %v1506
        %v1539 = vunpack.c.l.b16 %v1507
        %v1540 = vunpack.c.l.b16 %v1508
        %v1541 = vunpack.c.l.b16 %v1509
        %v1542 = vunpack.c.l.b16 %v1510
        %v1543 = vunpack.c.l.b16 %v1511
        %v1544 = vunpack.c.l.b16 %v1512
        %v1545 = vunpack.c.l.b16 %v1513
        %v1546 = vunpack.c.l.b16 %v1514
        %v1547 = vpack.c.b16 %v1532, %v1531
        %v1548 = vpack.c.b16 %v1534, %v1533
        %v1549 = vpack.c.b16 %v1536, %v1535
        %v1550 = vpack.c.b16 %v1538, %v1537
        %v1551 = vpack.c.b16 %v1540, %v1539
        %v1552 = vpack.c.b16 %v1542, %v1541
        %v1553 = vpack.c.b16 %v1544, %v1543
        %v1554 = vpack.c.b16 %v1546, %v1545
        %1563 = vmatprep.subr.bf16.mxu0 0
        %1564 = vmatpush1.bf16.msra.mxu0 %v1547
        %1565 = vmatprep.subr.bf16.mxu0 0
        %1566 = vmatpush1.bf16.msra.mxu0 %v1548
        %1567 = vmatprep.subr.bf16.mxu0 0
        %1568 = vmatpush1.bf16.msra.mxu0 %v1549
        %1569 = vmatprep.subr.bf16.mxu0 0
        %1570 = vmatpush1.bf16.msra.mxu0 %v1550
        %1571 = vmatprep.subr.bf16.mxu0 0
        %1572 = vmatpush1.bf16.msra.mxu0 %v1551
        %1573 = vmatprep.subr.bf16.mxu0 0
        %1574 = vmatpush1.bf16.msra.mxu0 %v1552
        %1575 = vmatprep.subr.bf16.mxu0 0
        %1576 = vmatpush1.bf16.msra.mxu0 %v1553
        %1577 = vmatprep.subr.bf16.mxu0 0
        %1578 = vmatpush1.bf16.msra.mxu0 %v1554
        %1579 = vmatprep.subr.bf16.mxu0 0
        %1580 = vmatpush1.bf16.msra.mxu0 0
        %1581 = vmatprep.subr.bf16.mxu0 0
        %1582 = vmatpush1.bf16.msra.mxu0 0
        %1583 = vmatprep.subr.bf16.mxu0 0
        %1584 = vmatpush1.bf16.msra.mxu0 0
        %1585 = vmatprep.subr.bf16.mxu0 0
        %1586 = vmatpush1.bf16.msra.mxu0 0
        %1587 = vmatprep.subr.bf16.mxu0 0
        %1588 = vmatpush1.bf16.msra.mxu0 0
        %1589 = vmatprep.subr.bf16.mxu0 0
        %1590 = vmatpush1.bf16.msra.mxu0 0
        %1591 = vmatprep.subr.bf16.mxu0 0
        %1592 = vmatpush1.bf16.msra.mxu0 0
        %1593 = vmatprep.subr.bf16.mxu0 0
        %1594 = vmatpush1.bf16.msra.mxu0 0
        %1595 = vmatprep.mubr.bf16.mxu0 0
        %1596 = vmatmul.mubr.bf16.gmra.mrb[0].mxu0 %v852
        %v1597 = vpop.f32.mrb[0].mxu0
        %v1598 = vadd.f32 0.0, %v1597
        %v1599 = vpop.f32.mrb[0].mxu0
        %v1600 = vpop.f32.mrb[0].mxu0
        %v1601 = vpop.f32.mrb[0].mxu0
        %1602 = vdwg.mxu0
        %v1619 = vunpack.c.l.b16 %v1481
        %v1620 = vunpack.c.l.b16 %v1482
        %v1621 = vunpack.c.l.b16 %v1483
        %v1622 = vunpack.c.l.b16 %v1484
        %v1623 = vunpack.c.l.b16 %v1485
        %v1624 = vunpack.c.l.b16 %v1486
        %v1625 = vunpack.c.l.b16 %v1487
        %v1626 = vunpack.c.l.b16 %v1488
        %v1627 = vunpack.c.l.b16 %v1489
        %v1628 = vunpack.c.l.b16 %v1490
        %v1629 = vunpack.c.l.b16 %v1491
        %v1630 = vunpack.c.l.b16 %v1492
        %v1631 = vunpack.c.l.b16 %v1493
        %v1632 = vunpack.c.l.b16 %v1494
        %v1633 = vunpack.c.l.b16 %v1495
        %v1634 = vunpack.c.l.b16 %v1496
        %v1635 = vpack.c.b16 %v1620, %v1619
        %v1636 = vpack.c.b16 %v1622, %v1621
        %v1637 = vpack.c.b16 %v1624, %v1623
        %v1638 = vpack.c.b16 %v1626, %v1625
        %v1639 = vpack.c.b16 %v1628, %v1627
        %v1640 = vpack.c.b16 %v1630, %v1629
        %v1641 = vpack.c.b16 %v1632, %v1631
        %v1642 = vpack.c.b16 %v1634, %v1633
        %1651 = vmatprep.subr.bf16.mxu0 0
        %1652 = vmatpush1.bf16.msra.mxu0 %v1635
        %1653 = vmatprep.subr.bf16.mxu0 0
        %1654 = vmatpush1.bf16.msra.mxu0 %v1636
        %1655 = vmatprep.subr.bf16.mxu0 0
        %1656 = vmatpush1.bf16.msra.mxu0 %v1637
        %1657 = vmatprep.subr.bf16.mxu0 0
        %1658 = vmatpush1.bf16.msra.mxu0 %v1638
        %1659 = vmatprep.subr.bf16.mxu0 0
        %1660 = vmatpush1.bf16.msra.mxu0 %v1639
        %1661 = vmatprep.subr.bf16.mxu0 0
        %1662 = vmatpush1.bf16.msra.mxu0 %v1640
        %1663 = vmatprep.subr.bf16.mxu0 0
        %1664 = vmatpush1.bf16.msra.mxu0 %v1641
        %1665 = vmatprep.subr.bf16.mxu0 0
        %1666 = vmatpush1.bf16.msra.mxu0 %v1642
        %1667 = vmatprep.subr.bf16.mxu0 0
        %1668 = vmatpush1.bf16.msra.mxu0 0
        %1669 = vmatprep.subr.bf16.mxu0 0
        %1670 = vmatpush1.bf16.msra.mxu0 0
        %1671 = vmatprep.subr.bf16.mxu0 0
        %1672 = vmatpush1.bf16.msra.mxu0 0
        %1673 = vmatprep.subr.bf16.mxu0 0
        %1674 = vmatpush1.bf16.msra.mxu0 0
        %1675 = vmatprep.subr.bf16.mxu0 0
        %1676 = vmatpush1.bf16.msra.mxu0 0
        %1677 = vmatprep.subr.bf16.mxu0 0
        %1678 = vmatpush1.bf16.msra.mxu0 0
        %1679 = vmatprep.subr.bf16.mxu0 0
        %1680 = vmatpush1.bf16.msra.mxu0 0
        %1681 = vmatprep.subr.bf16.mxu0 0
        %1682 = vmatpush1.bf16.msra.mxu0 0
        %1683 = vmatprep.mubr.bf16.mxu0 0
        %1684 = vmatmul.mubr.bf16.gmra.mrb[0].mxu0 %v851
        %v1685 = vpop.f32.mrb[0].mxu0
        %v1686 = vadd.f32 %v1598, %v1685
        %v1687 = vpop.f32.mrb[0].mxu0
        %v1688 = vpop.f32.mrb[0].mxu0
        %v1689 = vpop.f32.mrb[0].mxu0
        %1690 = vdwg.mxu0
        %s1691 = smul.addr %s854, 4
        %s1692 = scalar_lea.vmem [#allocation23], %s1691
        %v1693 = vld [vmem:[%s1692] sm:$0xf]
        %v1694 = vld [vmem:[%s1692 + $0x4] sm:$0xf]
        %v1695 = vld [vmem:[%s1692 + $0x8] sm:$0xf]
        %v1696 = vld [vmem:[%s1692 + $0xc] sm:$0xf]
        %v1701 = vunpack.c.l.b16 %v1693
        %v1702 = vunpack.c.l.b16 %v1694
        %v1703 = vunpack.c.l.b16 %v1695
        %v1704 = vunpack.c.l.b16 %v1696
        %v1705 = vpack.c.b16 %v1702, %v1701
        %v1706 = vpack.c.b16 %v1704, %v1703
        %1709 = vmatprep.subr.bf16.mxu0 0
        %1710 = vmatpush1.bf16.msra.mxu0 %v1705
        %1711 = vmatprep.subr.bf16.mxu0 0
        %1712 = vmatpush1.bf16.msra.mxu0 %v1706
        %1713 = vmatprep.subr.bf16.mxu0 0
        %1714 = vmatpush1.bf16.msra.mxu0 0
        %1715 = vmatprep.subr.bf16.mxu0 0
        %1716 = vmatpush1.bf16.msra.mxu0 0
        %1717 = vmatprep.subr.bf16.mxu0 0
        %1718 = vmatpush1.bf16.msra.mxu0 0
        %1719 = vmatprep.subr.bf16.mxu0 0
        %1720 = vmatpush1.bf16.msra.mxu0 0
        %1721 = vmatprep.subr.bf16.mxu0 0
        %1722 = vmatpush1.bf16.msra.mxu0 0
        %1723 = vmatprep.subr.bf16.mxu0 0
        %1724 = vmatpush1.bf16.msra.mxu0 0
        %1725 = vmatprep.subr.bf16.mxu0 0
        %1726 = vmatpush1.bf16.msra.mxu0 0
        %1727 = vmatprep.subr.bf16.mxu0 0
        %1728 = vmatpush1.bf16.msra.mxu0 0
        %1729 = vmatprep.subr.bf16.mxu0 0
        %1730 = vmatpush1.bf16.msra.mxu0 0
        %1731 = vmatprep.subr.bf16.mxu0 0
        %1732 = vmatpush1.bf16.msra.mxu0 0
        %1733 = vmatprep.subr.bf16.mxu0 0
        %1734 = vmatpush1.bf16.msra.mxu0 0
        %1735 = vmatprep.subr.bf16.mxu0 0
        %1736 = vmatpush1.bf16.msra.mxu0 0
        %1737 = vmatprep.subr.bf16.mxu0 0
        %1738 = vmatpush1.bf16.msra.mxu0 0
        %1739 = vmatprep.subr.bf16.mxu0 0
        %1740 = vmatpush1.bf16.msra.mxu0 0
        %1741 = vmatprep.mubr.bf16.mxu0 0
        %1742 = vmatmul.mubr.bf16.gmra.mrb[0].mxu0 %v875
        %v1743 = vpop.f32.mrb[0].mxu0
        %v1744 = vadd.f32 0.0, %v1743
        %v1745 = vpop.f32.mrb[0].mxu0
        %v1746 = vpop.f32.mrb[0].mxu0
        %v1747 = vpop.f32.mrb[0].mxu0
        %1748 = vdwg.mxu0
        %v1749 = vadd.f32 %v1686, %v1744
        %s1750 = scalar_lea.vmem [#allocation25], %s47
        %v1751 = vld [vmem:[%s1750] sm:$0x1]
        %v1752 = vunpack.c.l.bf16 %v1751
        %v1753 = vlaneseq
        %v1754 = vshrl.u32 %v1753, 7
        %v1755 = vsub.s32 0, %v1754
        %v1756 = vrot.slane %v1752, %v1755
        %v1757 = vadd.f32 %v1749, %v1756
        %v1758 = vpack.c.bf16 %v1757, %v1757
        %1759 = vst [vmem:[%s848] sm:$0xf] %v1758
        %s1760 = sand.u32 %s417, 1
        %s1761 = scalar_lea.sflag [#allocation4], %s1760
        %s1762 = sand.u32 %s417, 1
        %s1763 = smul.addr %s1762, 8
        %s1764 = scalar_lea.vmem [#allocation26], %s1763
        %s1765 = sand.u32 %s445, 1
        %s1766 = scalar_lea.sflag [#allocation28], %s1765
        %s1767 = sand.u32 %s445, 1
        %s1768 = smul.addr %s1767, 4
        %s1769 = scalar_lea.vmem [#allocation27], %s1768
        // Predicated region
        $region153: #{hetero_conv.1} parent=83 // pred_check
          %p1770 = pneg %p427
        $region154: #{hetero_conv.1} parent=83 // pred_check_branch
          %1772 = sbr.rel (%p1770) target = $region156
        $region155: #{hetero_conv.1} parent=83 // pred_region
          %s1774 = ssub.s32 128, 128
          %1775 = vsyncadd %s1761, %s1774
          %s1776 = smul.addr %s46, 128
          %s1777 = scalar_lea.hbm %s16, %s1776
          %s1779 = sshll.u32 %s1764, 4
          %s1780 = int_to_ptr.vmem [resolvable:$true] %s1779
          %1782 = dma.vmem_to_hbm [thread:$0]  %s1780, 128, %s1777, %s1761
        $region156: #{hetero_conv.1} parent=83 // pred_fallthru
          _
        // Predicated region
        $region157: #{hetero_conv.1} parent=83 // pred_check
          %p1783 = pneg %p455
        $region158: #{hetero_conv.1} parent=83 // pred_check_branch
          %1785 = sbr.rel (%p1783) target = $region160
        $region159: #{hetero_conv.1} parent=83 // pred_region
          %s1787 = ssub.s32 64, 64
          %1788 = vsyncadd %s1766, %s1787
          %s1789 = smul.addr %s47, 2
          %s1790 = sadd.s32 %s46, %s1789
          %s1791 = smul.addr %s1790, 64
          %s1792 = scalar_lea.hbm %s17, %s1791
          %s1794 = sshll.u32 %s1769, 4
          %s1795 = int_to_ptr.vmem [resolvable:$true] %s1794
          %1797 = dma.vmem_to_hbm [thread:$0]  %s1795, 64, %s1792, %s1766
        $region160: #{hetero_conv.1} parent=83 // pred_fallthru
          _
      $region84: #{hetero_conv.1} parent=5 // pred_fallthru
        _
      %p1798 = scmp.le.s32.totalorder 2, %s37
      // Predicated region
      $region161: #{hetero_conv.1} parent=5 // pred_check
        %p1799 = pneg %p1798
      $region162: #{hetero_conv.1} parent=5 // pred_check_branch
        %1801 = sbr.rel (%p1799) target = $region164
      $region163: #{hetero_conv.1} parent=5 // pred_region
        %s1802 = ssub.s32 %s37, 2
        // Predicated region
        $region165: #{hetero_conv.1} parent=163 // pred_check
          %p1803 = pneg %p433
        $region166: #{hetero_conv.1} parent=163 // pred_check_branch
          %1805 = sbr.rel (%p1803) target = $region168
        $region167: #{hetero_conv.1} parent=163 // pred_region
          %s1806 = sand.u32 %s418, 1
          %s1807 = scalar_lea.sflag [#allocation4], %s1806
          %s1808 = sand.u32 %s418, 1
          %s1809 = smul.addr %s1808, 8
          %s1810 = scalar_lea.vmem [#allocation26], %s1809
          %1811 = dma.done %s1807, 128
        $region168: #{hetero_conv.1} parent=163 // pred_fallthru
          _
        // Predicated region
        $region169: #{hetero_conv.1} parent=163 // pred_check
          %p1812 = pneg %p461
        $region170: #{hetero_conv.1} parent=163 // pred_check_branch
          %1814 = sbr.rel (%p1812) target = $region172
        $region171: #{hetero_conv.1} parent=163 // pred_region
          %s1815 = sand.u32 %s446, 1
          %s1816 = scalar_lea.sflag [#allocation28], %s1815
          %s1817 = sand.u32 %s446, 1
          %s1818 = smul.addr %s1817, 4
          %s1819 = scalar_lea.vmem [#allocation27], %s1818
          %1820 = dma.done %s1816, 64
        $region172: #{hetero_conv.1} parent=163 // pred_fallthru
          _
      $region164: #{hetero_conv.1} parent=5 // pred_fallthru
        _
    $region6: #{hetero_conv.1} parent=1 // loop_footer
      %s41 = sadd.s32 1, %s37
    $region7: #{hetero_conv.1} parent=1 // loop_footer_branch
      %36 = sbr.rel target = $region3
    $region8: #{hetero_conv.1} parent=1 // loop_exit
      _
    %1821 = vsyncpa [#allocation3], 1
    %s1822 = scalar_lea.sflag [#allocation3], 1
    %1823 = vsyncpa %s1822, 1
    %1824 = vsyncpa [#allocation6], 1
    %1825 = vsyncpa [#allocation12], 1
    %1826 = vsyncpa [#allocation15], 1
    %1827 = vsyncpa [#allocation18], 1
    %1828 = vsyncpa [#allocation21], 1
    %1829 = vsyncpa [#allocation24], 1
    %1830 = vsyncpa [#allocation4], 1
    %s1831 = scalar_lea.sflag [#allocation4], 1
    %1832 = vsyncpa %s1831, 1
    %1833 = vsyncpa [#allocation28], 1
    %s1834 = scalar_lea.sflag [#allocation28], 1
    %1835 = vsyncpa %s1834, 1

</llo_original>
